<compile_context>
chip_gen: v5e
topology: v5e:2x2
jax: 0.10.0
libtpu: 0.0.40
codegen_flags: <defaults>
</compile_context>

<pallas_src>
import jax
import jax.numpy as jnp
from jax.scipy import special as jsp
from jax.experimental import pallas as pl
from jax.experimental.pallas import tpu as pltpu

_SQRT2 = 1.4142135381698608  # float32 sqrt(2)


def _round_up(a, b):
    return (a + b - 1) // b * b


# ----------------------------------------------------------------------------
# exact (erf-based) GELU, matching PyTorch F.gelu default.
# erf uses the Eigen/XLA single-precision rational approximation (VPU ops);
# inside the kernel the divide uses the EUP reciprocal + one Newton step.
# ----------------------------------------------------------------------------
def _erf_poly(x, recip=None):
    x = jnp.clip(x, -4.0, 4.0)
    x2 = x * x
    p = x2 * (-2.72614225801306e-10) + 2.77068142495902e-08
    p = x2 * p + (-2.10102402082508e-06)
    p = x2 * p + (-5.69250639462346e-05)
    p = x2 * p + (-7.34990630326855e-04)
    p = x2 * p + (-2.95459980854025e-03)
    p = x2 * p + (-1.60960333262415e-02)
    p = p * x
    q = x2 * (-1.45660718464996e-05) + (-2.13374055278905e-04)
    q = x2 * q + (-1.68282697438203e-03)
    q = x2 * q + (-7.37332916720468e-03)
    q = x2 * q + (-1.42647390514189e-02)
    if recip is None:
        return p / q            # host / reference path: exact divide
    return p * recip(q)         # kernel path: EUP reciprocal (+ Newton step)


def _recip_newton(q):
    # EUP approximate reciprocal refined by one Newton step (2 VALU ops):
    # restores ~f32 parity for the GELU divide.
    r = pl.reciprocal(q, approx=True)
    return r * (2.0 - q * r)


def _gelu(x):
    # f32 exact-erf GELU on all TPU generations (see header note).
    return 0.5 * x * (1.0 + _erf_poly(x * (1.0 / _SQRT2), recip=_recip_newton))


# ----------------------------------------------------------------------------
# Kernel 1: SpectralConv2d complex mode mixing (lane-on-K VPU formulation).
#   out[b, o, k] = sum_i x[b, i, k] * w[i, o, k]   (complex, K on lanes)
# Grid = (K tiles, batch); batch block = 1.  The contraction over the (small)
# channel dim is a static unrolled loop; per-i operands are read from the VMEM
# refs (vld slots) rather than extracted in-vreg.
# ----------------------------------------------------------------------------
def _spec_mul_kernel(xr_ref, xi_ref, wr_ref, wi_ref, or_ref, oi_ref):
    cin = xr_ref.shape[1]
    xr0 = xr_ref[0, 0:1, :]                  # (1, KT)
    xi0 = xi_ref[0, 0:1, :]
    wr0 = wr_ref[0]                          # (Cout, KT)
    wi0 = wi_ref[0]
    acc_r = xr0 * wr0 - xi0 * wi0            # (Cout, KT) f32 accumulators
    acc_i = xr0 * wi0 + xi0 * wr0
    for i in range(1, cin):                  # static unroll; cin == width
        xri = xr_ref[0, i:i + 1, :]          # per-i vld from VMEM
        xii = xi_ref[0, i:i + 1, :]
        wri = wr_ref[i]
        wii = wi_ref[i]
        acc_r = acc_r + xri * wri - xii * wii
        acc_i = acc_i + xri * wii + xii * wri
    or_ref[0] = acc_r
    oi_ref[0] = acc_i


def _spec_k_tile(Kp, cin, cout, batch):
    # kt always divides Kp (Kp is already a multiple of 128 -> zero extra
    # padding traffic), bounded by:
    #  - weight DMA block size (<= 2 MiB per real/imag block),
    #  - accumulator/operand vreg pressure of the unrolled cin loop
    #    (2*(cin+cout)*kt*4 bytes kept well under the 256 KiB vreg file;
    #    for very large widths a Cout grid axis would be the next step),
    # and, when batch == 1, capped so the grid still has >= 2 steps to feed
    # both v7x TensorCores.
    m = Kp // 128
    dma_cap = (2 * 1024 * 1024) // (cin * cout * 4)
    vreg_cap = (128 * 1024) // (8 * (cin + cout))
    cap = max(128, min(dma_cap, vreg_cap) // 128 * 128)
    d_cap = max(1, min(m, cap // 128))
    if batch == 1 and m >= 2:
        d_cap = min(d_cap, max(1, m // 2))
    for d in range(d_cap, 0, -1):
        if m % d == 0:
            return 128 * d
    return 128


def _prep_spec_weights(w1, w2):
    # (Cin, Cout, V, m1, m2) complex x2 -> (Cin, Cout, Kp) real/imag pair,
    # flattened mode axis [w1-block | w2-block], zero-padded to a multiple of
    # 128 only (the kernel tile kt always divides Kp).
    cin, cout = w1.shape[0], w1.shape[1]
    wc = jnp.concatenate([w1, w2], axis=3).reshape(cin, cout, -1)
    K = wc.shape[2]
    Kp = _round_up(K, 128)
    pad = ((0, 0), (0, 0), (0, Kp - K))
    wr = jnp.pad(jnp.real(wc).astype(jnp.float32), pad)
    wi = jnp.pad(jnp.imag(wc).astype(jnp.float32), pad)
    return wr, wi


def _spectral_mode_mul(xr, xi, wr, wi, kt):
    B, Cin, Kp = xr.shape
    Cout = wr.shape[1]
    # Grid order (k, b): weight blocks only change with k -> streamed once.
    x_spec = pl.BlockSpec((1, Cin, kt), lambda k, b: (b, 0, k))
    w_spec = pl.BlockSpec((Cin, Cout, kt), lambda k, b: (0, 0, k))
    o_spec = pl.BlockSpec((1, Cout, kt), lambda k, b: (b, 0, k))
    return pl.pallas_call(
        _spec_mul_kernel,
        out_shape=(jax.ShapeDtypeStruct((B, Cout, Kp), jnp.float32),
                   jax.ShapeDtypeStruct((B, Cout, Kp), jnp.float32)),
        grid=(Kp // kt, B),
        in_specs=[x_spec, x_spec, w_spec, w_spec],
        out_specs=(o_spec, o_spec),
        compiler_params=pltpu.CompilerParams(
            dimension_semantics=("parallel", "parallel")),
    )(xr, xi, wr, wi)


def spectral_conv2d(x, spec_wr, spec_wi, modes1, modes2):
    # x: (B, Cin, V, H, W) float32
    B, Cin, V, H, W = x.shape
    Cout, Kp = spec_wr.shape[1], spec_wr.shape[2]
    Wf = W // 2 + 1
    # The PyTorch code silently lets the two mode blocks overlap (second
    # scatter overwrites the first) when 2*modes1 > H; assert against it.
    assert 2 * modes1 <= H and modes2 <= Wf, "spectral modes exceed grid size"

    x_ft = jnp.fft.rfft2(x)                               # (B, Cin, V, H, Wf) c64
    xsel = jnp.concatenate([x_ft[:, :, :, :modes1, :modes2],
                            x_ft[:, :, :, -modes1:, :modes2]], axis=3)
    xsel = xsel.reshape(B, Cin, -1)                       # (B, Cin, K) -- tiny
    K = xsel.shape[2]
    xr = jnp.real(xsel)
    xi = jnp.imag(xsel)
    if Kp != K:                                           # pad to lane multiple
        kpad = ((0, 0), (0, 0), (0, Kp - K))
        xr, xi = jnp.pad(xr, kpad), jnp.pad(xi, kpad)

    kt = _spec_k_tile(Kp, Cin, Cout, B)
    out_r, out_i = _spectral_mode_mul(xr, xi, spec_wr, spec_wi, kt)
    out = jax.lax.complex(out_r[:, :, :K], out_i[:, :, :K])
    out = out.reshape(B, Cout, V, 2 * modes1, modes2)

    # Build the full spectrum with concat + pad (one fused write) instead of
    # zeros + two scatter updates (which re-write the whole spectrum in HBM).
    zmid = jnp.zeros((B, Cout, V, H - 2 * modes1, modes2), jnp.complex64)
    out_ft = jnp.concatenate(
        [out[:, :, :, :modes1, :], zmid, out[:, :, :, modes1:, :]], axis=3)
    out_ft = jnp.pad(out_ft,
                     ((0, 0), (0, 0), (0, 0), (0, 0), (0, Wf - modes2)))
    return jnp.fft.irfft2(out_ft, s=(H, W))               # (B, Cout, V, H, W) f32


# ----------------------------------------------------------------------------
# Kernel 2: fused point-wise tail of FNO2d
#   out = gelu( mlp2(gelu(mlp1(x1))) + w(x) + b(grid) )
# Layout: channels on sublanes, flattened pixels on lanes (lane-dense loads,
# unmasked stores).  mlp2/w/b are fused into one (C, 2C+2) @ (2C+2, T) bf16
# matmul with f32 accumulation; all tail biases folded into bc.
# ----------------------------------------------------------------------------
def _fno_pointwise_kernel(x1_ref, x_ref, g_ref,
                          w1_ref, b1_ref, wcat_ref, bc_ref, o_ref):
    x1 = x1_ref[0].astype(jnp.bfloat16)                   # (C, T) spectral branch
    h = jnp.dot(w1_ref[...], x1, preferred_element_type=jnp.float32) + b1_ref[...]
    h = _gelu(h)                                          # f32 exact-erf GELU
    # f32 sublane concat at 8-row-aligned offsets, single cast to bf16.
    cat = jnp.concatenate([h, x_ref[0], g_ref[0]], axis=0).astype(jnp.bfloat16)
    y = jnp.dot(wcat_ref[...], cat, preferred_element_type=jnp.float32)
    y = y + bc_ref[...]                                   # folded mlp2_b+w_b+b_b
    o_ref[0] = _gelu(y)


def _pw_tile(Np, C):
    # Largest multiple-of-128 divisor of Np, capped at 8192 lanes and by a
    # conservative VMEM budget for the double-buffered row streams
    # (x1, x, grid, out) so we stay well under the scoped-VMEM defaults
    # (16 MiB v5e / 32 MiB v6e, v7x) without touching vmem_limit_bytes.
    m = Np // 128
    vmem_cap = (8 * 1024 * 1024) // (8 * (3 * C + 2))
    cap = max(128, min(8192, vmem_cap // 128 * 128))
    d_cap = max(1, min(m, cap // 128))
    for d in range(d_cap, 0, -1):
        if m % d == 0:
            return 128 * d
    return 128


def fno_pointwise(x1, x, grid, p):
    B, C, V, H, W = x1.shape
    N = V * H * W
    # free reshapes — no HBM transposes anywhere in this stage
    # (folding B into the lane axis would need a (B,C,N)->(C,B*N) transpose).
    x1f = x1.reshape(B, C, N)
    xf = x.reshape(B, C, N)
    gf = grid.reshape(B, 2, N)

    Np = _round_up(N, 128)
    if Np != N:
        # Ragged tail fallback; N = vars*H*W is a multiple of 128 for typical
        # FNO grids so this pad/slice pass does not trigger.
        pad = ((0, 0), (0, 0), (0, Np - N))
        x1f, xf, gf = jnp.pad(x1f, pad), jnp.pad(xf, pad), jnp.pad(gf, pad)
    tile = _pw_tile(Np, C)

    # Weight prep (constant-folded under jit): bf16 matmul operands with f32
    # accumulation in-kernel; second-stage weights fused [mlp2 | w | b];
    # tail biases folded into one column.
    w1 = p["mlp1_w"].astype(jnp.bfloat16)                          # (C, C)
    b1 = p["mlp1_b"].reshape(C, 1)                                 # (C, 1) f32
    wcat = jnp.concatenate([p["mlp2_w"], p["w_w"], p["b_w"]],
                           axis=1).astype(jnp.bfloat16)            # (C, 2C+2)
    bc = (p["mlp2_b"] + p["w_b"] + p["b_b"]).reshape(C, 1)         # (C, 1) f32

    def row(ch):
        return pl.BlockSpec((1, ch, tile), lambda b, i: (b, 0, i))

    def resident(shape):                                  # same block every step
        return pl.BlockSpec(shape, lambda b, i: (0, 0))

    out = pl.pallas_call(
        _fno_pointwise_kernel,
        out_shape=jax.ShapeDtypeStruct((B, C, Np), jnp.float32),
        grid=(B, Np // tile),
        in_specs=[row(C), row(C), row(2),
                  resident((C, C)), resident((C, 1)),
                  resident((C, 2 * C + 2)), resident((C, 1))],
        out_specs=row(C),
        compiler_params=pltpu.CompilerParams(
            dimension_semantics=("parallel", "parallel")),
    )(x1f, xf, gf, w1, b1, wcat, bc)
    if Np != N:
        out = out[:, :, :N]
    return out.reshape(B, C, V, H, W)


# ----------------------------------------------------------------------------
# Full FNO2d forward.
# ----------------------------------------------------------------------------
def fno2d_forward(params, x, grid):
    x1 = spectral_conv2d(x, params["spec_wr"], params["spec_wi"],
                         params["modes1"], params["modes2"])
    return fno_pointwise(x1, x, grid, params)


# ----------------------------------------------------------------------------
# Deterministic parameter init (mirrors shapes in the PyTorch __init__).
# Conv weights are stored PyTorch-style as (Cout, Cin); biases as (Cout,).
# Spectral weights are additionally stored pre-split / flattened / 128-padded.
# ----------------------------------------------------------------------------
def init_params(key, modes1, modes2, num_vars, width):
    C = width
    keys = jax.random.split(key, 12)
    scale = 1.0 / C
    spec_shape = (C, C, num_vars, modes1, modes2)

    def crand(kr, ki):
        return scale * (jax.random.uniform(kr, spec_shape, jnp.float32)
                        + 1j * jax.random.uniform(ki, spec_shape, jnp.float32))

    def conv_init(kw, kb, cin, cout):
        bound = 1.0 / (cin ** 0.5)
        w = jax.random.uniform(kw, (cout, cin), jnp.float32, -bound, bound)
        b = jax.random.uniform(kb, (cout,), jnp.float32, -bound, bound)
        return w, b

    spec_w1 = crand(keys[0], keys[1])
    spec_w2 = crand(keys[10], keys[11])
    spec_wr, spec_wi = _prep_spec_weights(spec_w1, spec_w2)

    mlp1_w, mlp1_b = conv_init(keys[2], keys[3], C, C)
    mlp2_w, mlp2_b = conv_init(keys[4], keys[5], C, C)
    w_w, w_b = conv_init(keys[6], keys[7], C, C)
    b_w, b_b = conv_init(keys[8], keys[9], 2, C)
    return dict(modes1=modes1, modes2=modes2,
                spec_w1=spec_w1, spec_w2=spec_w2,
                spec_wr=spec_wr, spec_wi=spec_wi,
                mlp1_w=mlp1_w, mlp1_b=mlp1_b, mlp2_w=mlp2_w, mlp2_b=mlp2_b,
                w_w=w_w, w_b=w_b, b_w=b_w, b_b=b_b)


# ----------------------------------------------------------------------------
# Pure-JAX f32 reference (semantics identical to the PyTorch forward).
# ----------------------------------------------------------------------------
def ref_forward(params, x, grid):
    m1, m2 = params["modes1"], params["modes2"]
    B, C, V, H, W = x.shape
    x_ft = jnp.fft.rfft2(x)
    out_ft = jnp.zeros((B, C, V, H, W // 2 + 1), dtype=jnp.complex64)
    out_ft = out_ft.at[:, :, :, :m1, :m2].set(
        jnp.einsum("bivxy,iovxy->bovxy", x_ft[:, :, :, :m1, :m2], params["spec_w1"]))
    out_ft = out_ft.at[:, :, :, -m1:, :m2].set(
        jnp.einsum("bivxy,iovxy->bovxy", x_ft[:, :, :, -m1:, :m2], params["spec_w2"]))
    x1 = jnp.fft.irfft2(out_ft, s=(H, W))

    def conv1x1(a, w, b):  # w: (Cout, Cin), b: (Cout,)
        return jnp.einsum("bivhw,oi->bovhw", a, w) + b[None, :, None, None, None]

    def gelu(v):
        return 0.5 * v * (1.0 + jsp.erf(v / jnp.sqrt(2.0)))

    x1 = conv1x1(x1, params["mlp1_w"], params["mlp1_b"])
    x1 = gelu(x1)
    x1 = conv1x1(x1, params["mlp2_w"], params["mlp2_b"])
    x2 = conv1x1(x, params["w_w"], params["w_b"])
    x3 = conv1x1(grid, params["b_w"], params["b_b"])
    return gelu(x1 + x2 + x3)


if __name__ == "__main__":
    modes1, modes2, num_vars, width = 4, 4, 2, 8
    B, H, W = 2, 16, 16

    key = jax.random.PRNGKey(0)
    kp, kx = jax.random.split(key)
    params = init_params(kp, modes1, modes2, num_vars, width)

    x = jax.random.normal(kx, (B, width, num_vars, H, W), dtype=jnp.float32)
    gy = jnp.linspace(0.0, 1.0, H, dtype=jnp.float32)
    gx = jnp.linspace(0.0, 1.0, W, dtype=jnp.float32)
    gyy, gxx = jnp.meshgrid(gy, gx, indexing="ij")
    grid = jnp.stack([gyy, gxx], axis=0)[None, :, None, :, :]
    grid = jnp.broadcast_to(grid, (B, 2, num_vars, H, W)).astype(jnp.float32)

    # Validate the rational erf approximation against jax.scipy erf (f32).
    t = jnp.linspace(-6.0, 6.0, 4097, dtype=jnp.float32)
    erf_err = float(jnp.max(jnp.abs(_erf_poly(t) - jsp.erf(t))))
    assert erf_err < 5e-6, f"erf approximation error too large: {erf_err}"

    fwd = jax.jit(lambda xx, gg: fno2d_forward(params, xx, gg))
    out = jax.block_until_ready(fwd(x, grid))
    assert out.shape == (B, width, num_vars, H, W)
    assert out.dtype == jnp.float32

    # Tolerance covers the intentional bf16 matmul-operand casts
    # (f32 accumulation, f32 GELUs, Newton-refined reciprocal).
    ref = ref_forward(params, x, grid)
    err = float(jnp.max(jnp.abs(out - ref)))
    assert err < 5e-2, f"max abs err too large: {err}"
    print("KERNEL_OK")
</pallas_src>

<mosaic_0001>
module attributes {stable_mosaic.version = 11 : i64} {
  func.func @_spec_mul_kernel(%arg0: i32, %arg1: i32, %arg2: memref<1x8x128xf32, #tpu.memory_space<vmem>>, %arg3: memref<1x8x128xf32, #tpu.memory_space<vmem>>, %arg4: memref<8x8x128xf32, #tpu.memory_space<vmem>>, %arg5: memref<8x8x128xf32, #tpu.memory_space<vmem>>, %arg6: memref<1x8x128xf32, #tpu.memory_space<vmem>>, %arg7: memref<1x8x128xf32, #tpu.memory_space<vmem>>) attributes {dimension_semantics = [#tpu.dimension_semantics<parallel>, #tpu.dimension_semantics<parallel>], iteration_bounds = array<i64: 1, 2>, scalar_prefetch = 0 : i64, scratch_operands = 0 : i64, tpu.core_type = #tpu.core_type<tc>, window_params = [{transform_indices = @transform_0, window_bounds = array<i64: 1, 8, 128>}, {transform_indices = @transform_1, window_bounds = array<i64: 1, 8, 128>}, {transform_indices = @transform_2, window_bounds = array<i64: 8, 8, 128>}, {transform_indices = @transform_3, window_bounds = array<i64: 8, 8, 128>}, {transform_indices = @transform_4, window_bounds = array<i64: 1, 8, 128>}, {transform_indices = @transform_5, window_bounds = array<i64: 1, 8, 128>}]} {
    %c0 = arith.constant 0 : index
    %c0_0 = arith.constant 0 : index
    %c0_1 = arith.constant 0 : index
    %0 = vector.load %arg2[%c0, %c0_0, %c0_1] : memref<1x8x128xf32, #tpu.memory_space<vmem>>, vector<1x1x128xf32>
    %1 = vector.shape_cast %0 : vector<1x1x128xf32> to vector<1x128xf32>
    %c0_2 = arith.constant 0 : index
    %c0_3 = arith.constant 0 : index
    %c0_4 = arith.constant 0 : index
    %2 = vector.load %arg3[%c0_2, %c0_3, %c0_4] : memref<1x8x128xf32, #tpu.memory_space<vmem>>, vector<1x1x128xf32>
    %3 = vector.shape_cast %2 : vector<1x1x128xf32> to vector<1x128xf32>
    %c0_5 = arith.constant 0 : index
    %c0_6 = arith.constant 0 : index
    %c0_7 = arith.constant 0 : index
    %4 = vector.load %arg4[%c0_5, %c0_6, %c0_7] : memref<8x8x128xf32, #tpu.memory_space<vmem>>, vector<1x8x128xf32>
    %5 = vector.shape_cast %4 : vector<1x8x128xf32> to vector<8x128xf32>
    %c0_8 = arith.constant 0 : index
    %c0_9 = arith.constant 0 : index
    %c0_10 = arith.constant 0 : index
    %6 = vector.load %arg5[%c0_8, %c0_9, %c0_10] : memref<8x8x128xf32, #tpu.memory_space<vmem>>, vector<1x8x128xf32>
    %7 = vector.shape_cast %6 : vector<1x8x128xf32> to vector<8x128xf32>
    %8 = vector.broadcast %1 : vector<1x128xf32> to vector<8x128xf32>
    %9 = arith.mulf %8, %5 : vector<8x128xf32>
    %10 = vector.broadcast %3 : vector<1x128xf32> to vector<8x128xf32>
    %11 = arith.mulf %10, %7 : vector<8x128xf32>
    %12 = arith.subf %9, %11 : vector<8x128xf32>
    %13 = vector.broadcast %1 : vector<1x128xf32> to vector<8x128xf32>
    %14 = arith.mulf %13, %7 : vector<8x128xf32>
    %15 = vector.broadcast %3 : vector<1x128xf32> to vector<8x128xf32>
    %16 = arith.mulf %15, %5 : vector<8x128xf32>
    %17 = arith.addf %14, %16 : vector<8x128xf32>
    %c0_11 = arith.constant 0 : index
    %c1 = arith.constant 1 : index
    %c0_12 = arith.constant 0 : index
    %18 = vector.load %arg2[%c0_11, %c1, %c0_12] : memref<1x8x128xf32, #tpu.memory_space<vmem>>, vector<1x1x128xf32>
    %19 = vector.shape_cast %18 : vector<1x1x128xf32> to vector<1x128xf32>
    %c0_13 = arith.constant 0 : index
    %c1_14 = arith.constant 1 : index
    %c0_15 = arith.constant 0 : index
    %20 = vector.load %arg3[%c0_13, %c1_14, %c0_15] : memref<1x8x128xf32, #tpu.memory_space<vmem>>, vector<1x1x128xf32>
    %21 = vector.shape_cast %20 : vector<1x1x128xf32> to vector<1x128xf32>
    %c1_16 = arith.constant 1 : index
    %c0_17 = arith.constant 0 : index
    %c0_18 = arith.constant 0 : index
    %22 = vector.load %arg4[%c1_16, %c0_17, %c0_18] : memref<8x8x128xf32, #tpu.memory_space<vmem>>, vector<1x8x128xf32>
    %23 = vector.shape_cast %22 : vector<1x8x128xf32> to vector<8x128xf32>
    %c1_19 = arith.constant 1 : index
    %c0_20 = arith.constant 0 : index
    %c0_21 = arith.constant 0 : index
    %24 = vector.load %arg5[%c1_19, %c0_20, %c0_21] : memref<8x8x128xf32, #tpu.memory_space<vmem>>, vector<1x8x128xf32>
    %25 = vector.shape_cast %24 : vector<1x8x128xf32> to vector<8x128xf32>
    %26 = vector.broadcast %19 : vector<1x128xf32> to vector<8x128xf32>
    %27 = arith.mulf %26, %23 : vector<8x128xf32>
    %28 = arith.addf %12, %27 : vector<8x128xf32>
    %29 = vector.broadcast %21 : vector<1x128xf32> to vector<8x128xf32>
    %30 = arith.mulf %29, %25 : vector<8x128xf32>
    %31 = arith.subf %28, %30 : vector<8x128xf32>
    %32 = vector.broadcast %19 : vector<1x128xf32> to vector<8x128xf32>
    %33 = arith.mulf %32, %25 : vector<8x128xf32>
    %34 = arith.addf %17, %33 : vector<8x128xf32>
    %35 = vector.broadcast %21 : vector<1x128xf32> to vector<8x128xf32>
    %36 = arith.mulf %35, %23 : vector<8x128xf32>
    %37 = arith.addf %34, %36 : vector<8x128xf32>
    %c0_22 = arith.constant 0 : index
    %c2 = arith.constant 2 : index
    %c0_23 = arith.constant 0 : index
    %38 = vector.load %arg2[%c0_22, %c2, %c0_23] : memref<1x8x128xf32, #tpu.memory_space<vmem>>, vector<1x1x128xf32>
    %39 = vector.shape_cast %38 : vector<1x1x128xf32> to vector<1x128xf32>
    %c0_24 = arith.constant 0 : index
    %c2_25 = arith.constant 2 : index
    %c0_26 = arith.constant 0 : index
    %40 = vector.load %arg3[%c0_24, %c2_25, %c0_26] : memref<1x8x128xf32, #tpu.memory_space<vmem>>, vector<1x1x128xf32>
    %41 = vector.shape_cast %40 : vector<1x1x128xf32> to vector<1x128xf32>
    %c2_27 = arith.constant 2 : index
    %c0_28 = arith.constant 0 : index
    %c0_29 = arith.constant 0 : index
    %42 = vector.load %arg4[%c2_27, %c0_28, %c0_29] : memref<8x8x128xf32, #tpu.memory_space<vmem>>, vector<1x8x128xf32>
    %43 = vector.shape_cast %42 : vector<1x8x128xf32> to vector<8x128xf32>
    %c2_30 = arith.constant 2 : index
    %c0_31 = arith.constant 0 : index
    %c0_32 = arith.constant 0 : index
    %44 = vector.load %arg5[%c2_30, %c0_31, %c0_32] : memref<8x8x128xf32, #tpu.memory_space<vmem>>, vector<1x8x128xf32>
    %45 = vector.shape_cast %44 : vector<1x8x128xf32> to vector<8x128xf32>
    %46 = vector.broadcast %39 : vector<1x128xf32> to vector<8x128xf32>
    %47 = arith.mulf %46, %43 : vector<8x128xf32>
    %48 = arith.addf %31, %47 : vector<8x128xf32>
    %49 = vector.broadcast %41 : vector<1x128xf32> to vector<8x128xf32>
    %50 = arith.mulf %49, %45 : vector<8x128xf32>
    %51 = arith.subf %48, %50 : vector<8x128xf32>
    %52 = vector.broadcast %39 : vector<1x128xf32> to vector<8x128xf32>
    %53 = arith.mulf %52, %45 : vector<8x128xf32>
    %54 = arith.addf %37, %53 : vector<8x128xf32>
    %55 = vector.broadcast %41 : vector<1x128xf32> to vector<8x128xf32>
    %56 = arith.mulf %55, %43 : vector<8x128xf32>
    %57 = arith.addf %54, %56 : vector<8x128xf32>
    %c0_33 = arith.constant 0 : index
    %c3 = arith.constant 3 : index
    %c0_34 = arith.constant 0 : index
    %58 = vector.load %arg2[%c0_33, %c3, %c0_34] : memref<1x8x128xf32, #tpu.memory_space<vmem>>, vector<1x1x128xf32>
    %59 = vector.shape_cast %58 : vector<1x1x128xf32> to vector<1x128xf32>
    %c0_35 = arith.constant 0 : index
    %c3_36 = arith.constant 3 : index
    %c0_37 = arith.constant 0 : index
    %60 = vector.load %arg3[%c0_35, %c3_36, %c0_37] : memref<1x8x128xf32, #tpu.memory_space<vmem>>, vector<1x1x128xf32>
    %61 = vector.shape_cast %60 : vector<1x1x128xf32> to vector<1x128xf32>
    %c3_38 = arith.constant 3 : index
    %c0_39 = arith.constant 0 : index
    %c0_40 = arith.constant 0 : index
    %62 = vector.load %arg4[%c3_38, %c0_39, %c0_40] : memref<8x8x128xf32, #tpu.memory_space<vmem>>, vector<1x8x128xf32>
    %63 = vector.shape_cast %62 : vector<1x8x128xf32> to vector<8x128xf32>
    %c3_41 = arith.constant 3 : index
    %c0_42 = arith.constant 0 : index
    %c0_43 = arith.constant 0 : index
    %64 = vector.load %arg5[%c3_41, %c0_42, %c0_43] : memref<8x8x128xf32, #tpu.memory_space<vmem>>, vector<1x8x128xf32>
    %65 = vector.shape_cast %64 : vector<1x8x128xf32> to vector<8x128xf32>
    %66 = vector.broadcast %59 : vector<1x128xf32> to vector<8x128xf32>
    %67 = arith.mulf %66, %63 : vector<8x128xf32>
    %68 = arith.addf %51, %67 : vector<8x128xf32>
    %69 = vector.broadcast %61 : vector<1x128xf32> to vector<8x128xf32>
    %70 = arith.mulf %69, %65 : vector<8x128xf32>
    %71 = arith.subf %68, %70 : vector<8x128xf32>
    %72 = vector.broadcast %59 : vector<1x128xf32> to vector<8x128xf32>
    %73 = arith.mulf %72, %65 : vector<8x128xf32>
    %74 = arith.addf %57, %73 : vector<8x128xf32>
    %75 = vector.broadcast %61 : vector<1x128xf32> to vector<8x128xf32>
    %76 = arith.mulf %75, %63 : vector<8x128xf32>
    %77 = arith.addf %74, %76 : vector<8x128xf32>
    %c0_44 = arith.constant 0 : index
    %c4 = arith.constant 4 : index
    %c0_45 = arith.constant 0 : index
    %78 = vector.load %arg2[%c0_44, %c4, %c0_45] : memref<1x8x128xf32, #tpu.memory_space<vmem>>, vector<1x1x128xf32>
    %79 = vector.shape_cast %78 : vector<1x1x128xf32> to vector<1x128xf32>
    %c0_46 = arith.constant 0 : index
    %c4_47 = arith.constant 4 : index
    %c0_48 = arith.constant 0 : index
    %80 = vector.load %arg3[%c0_46, %c4_47, %c0_48] : memref<1x8x128xf32, #tpu.memory_space<vmem>>, vector<1x1x128xf32>
    %81 = vector.shape_cast %80 : vector<1x1x128xf32> to vector<1x128xf32>
    %c4_49 = arith.constant 4 : index
    %c0_50 = arith.constant 0 : index
    %c0_51 = arith.constant 0 : index
    %82 = vector.load %arg4[%c4_49, %c0_50, %c0_51] : memref<8x8x128xf32, #tpu.memory_space<vmem>>, vector<1x8x128xf32>
    %83 = vector.shape_cast %82 : vector<1x8x128xf32> to vector<8x128xf32>
    %c4_52 = arith.constant 4 : index
    %c0_53 = arith.constant 0 : index
    %c0_54 = arith.constant 0 : index
    %84 = vector.load %arg5[%c4_52, %c0_53, %c0_54] : memref<8x8x128xf32, #tpu.memory_space<vmem>>, vector<1x8x128xf32>
    %85 = vector.shape_cast %84 : vector<1x8x128xf32> to vector<8x128xf32>
    %86 = vector.broadcast %79 : vector<1x128xf32> to vector<8x128xf32>
    %87 = arith.mulf %86, %83 : vector<8x128xf32>
    %88 = arith.addf %71, %87 : vector<8x128xf32>
    %89 = vector.broadcast %81 : vector<1x128xf32> to vector<8x128xf32>
    %90 = arith.mulf %89, %85 : vector<8x128xf32>
    %91 = arith.subf %88, %90 : vector<8x128xf32>
    %92 = vector.broadcast %79 : vector<1x128xf32> to vector<8x128xf32>
    %93 = arith.mulf %92, %85 : vector<8x128xf32>
    %94 = arith.addf %77, %93 : vector<8x128xf32>
    %95 = vector.broadcast %81 : vector<1x128xf32> to vector<8x128xf32>
    %96 = arith.mulf %95, %83 : vector<8x128xf32>
    %97 = arith.addf %94, %96 : vector<8x128xf32>
    %c0_55 = arith.constant 0 : index
    %c5 = arith.constant 5 : index
    %c0_56 = arith.constant 0 : index
    %98 = vector.load %arg2[%c0_55, %c5, %c0_56] : memref<1x8x128xf32, #tpu.memory_space<vmem>>, vector<1x1x128xf32>
    %99 = vector.shape_cast %98 : vector<1x1x128xf32> to vector<1x128xf32>
    %c0_57 = arith.constant 0 : index
    %c5_58 = arith.constant 5 : index
    %c0_59 = arith.constant 0 : index
    %100 = vector.load %arg3[%c0_57, %c5_58, %c0_59] : memref<1x8x128xf32, #tpu.memory_space<vmem>>, vector<1x1x128xf32>
    %101 = vector.shape_cast %100 : vector<1x1x128xf32> to vector<1x128xf32>
    %c5_60 = arith.constant 5 : index
    %c0_61 = arith.constant 0 : index
    %c0_62 = arith.constant 0 : index
    %102 = vector.load %arg4[%c5_60, %c0_61, %c0_62] : memref<8x8x128xf32, #tpu.memory_space<vmem>>, vector<1x8x128xf32>
    %103 = vector.shape_cast %102 : vector<1x8x128xf32> to vector<8x128xf32>
    %c5_63 = arith.constant 5 : index
    %c0_64 = arith.constant 0 : index
    %c0_65 = arith.constant 0 : index
    %104 = vector.load %arg5[%c5_63, %c0_64, %c0_65] : memref<8x8x128xf32, #tpu.memory_space<vmem>>, vector<1x8x128xf32>
    %105 = vector.shape_cast %104 : vector<1x8x128xf32> to vector<8x128xf32>
    %106 = vector.broadcast %99 : vector<1x128xf32> to vector<8x128xf32>
    %107 = arith.mulf %106, %103 : vector<8x128xf32>
    %108 = arith.addf %91, %107 : vector<8x128xf32>
    %109 = vector.broadcast %101 : vector<1x128xf32> to vector<8x128xf32>
    %110 = arith.mulf %109, %105 : vector<8x128xf32>
    %111 = arith.subf %108, %110 : vector<8x128xf32>
    %112 = vector.broadcast %99 : vector<1x128xf32> to vector<8x128xf32>
    %113 = arith.mulf %112, %105 : vector<8x128xf32>
    %114 = arith.addf %97, %113 : vector<8x128xf32>
    %115 = vector.broadcast %101 : vector<1x128xf32> to vector<8x128xf32>
    %116 = arith.mulf %115, %103 : vector<8x128xf32>
    %117 = arith.addf %114, %116 : vector<8x128xf32>
    %c0_66 = arith.constant 0 : index
    %c6 = arith.constant 6 : index
    %c0_67 = arith.constant 0 : index
    %118 = vector.load %arg2[%c0_66, %c6, %c0_67] : memref<1x8x128xf32, #tpu.memory_space<vmem>>, vector<1x1x128xf32>
    %119 = vector.shape_cast %118 : vector<1x1x128xf32> to vector<1x128xf32>
    %c0_68 = arith.constant 0 : index
    %c6_69 = arith.constant 6 : index
    %c0_70 = arith.constant 0 : index
    %120 = vector.load %arg3[%c0_68, %c6_69, %c0_70] : memref<1x8x128xf32, #tpu.memory_space<vmem>>, vector<1x1x128xf32>
    %121 = vector.shape_cast %120 : vector<1x1x128xf32> to vector<1x128xf32>
    %c6_71 = arith.constant 6 : index
    %c0_72 = arith.constant 0 : index
    %c0_73 = arith.constant 0 : index
    %122 = vector.load %arg4[%c6_71, %c0_72, %c0_73] : memref<8x8x128xf32, #tpu.memory_space<vmem>>, vector<1x8x128xf32>
    %123 = vector.shape_cast %122 : vector<1x8x128xf32> to vector<8x128xf32>
    %c6_74 = arith.constant 6 : index
    %c0_75 = arith.constant 0 : index
    %c0_76 = arith.constant 0 : index
    %124 = vector.load %arg5[%c6_74, %c0_75, %c0_76] : memref<8x8x128xf32, #tpu.memory_space<vmem>>, vector<1x8x128xf32>
    %125 = vector.shape_cast %124 : vector<1x8x128xf32> to vector<8x128xf32>
    %126 = vector.broadcast %119 : vector<1x128xf32> to vector<8x128xf32>
    %127 = arith.mulf %126, %123 : vector<8x128xf32>
    %128 = arith.addf %111, %127 : vector<8x128xf32>
    %129 = vector.broadcast %121 : vector<1x128xf32> to vector<8x128xf32>
    %130 = arith.mulf %129, %125 : vector<8x128xf32>
    %131 = arith.subf %128, %130 : vector<8x128xf32>
    %132 = vector.broadcast %119 : vector<1x128xf32> to vector<8x128xf32>
    %133 = arith.mulf %132, %125 : vector<8x128xf32>
    %134 = arith.addf %117, %133 : vector<8x128xf32>
    %135 = vector.broadcast %121 : vector<1x128xf32> to vector<8x128xf32>
    %136 = arith.mulf %135, %123 : vector<8x128xf32>
    %137 = arith.addf %134, %136 : vector<8x128xf32>
    %c0_77 = arith.constant 0 : index
    %c7 = arith.constant 7 : index
    %c0_78 = arith.constant 0 : index
    %138 = vector.load %arg2[%c0_77, %c7, %c0_78] : memref<1x8x128xf32, #tpu.memory_space<vmem>>, vector<1x1x128xf32>
    %139 = vector.shape_cast %138 : vector<1x1x128xf32> to vector<1x128xf32>
    %c0_79 = arith.constant 0 : index
    %c7_80 = arith.constant 7 : index
    %c0_81 = arith.constant 0 : index
    %140 = vector.load %arg3[%c0_79, %c7_80, %c0_81] : memref<1x8x128xf32, #tpu.memory_space<vmem>>, vector<1x1x128xf32>
    %141 = vector.shape_cast %140 : vector<1x1x128xf32> to vector<1x128xf32>
    %c7_82 = arith.constant 7 : index
    %c0_83 = arith.constant 0 : index
    %c0_84 = arith.constant 0 : index
    %142 = vector.load %arg4[%c7_82, %c0_83, %c0_84] : memref<8x8x128xf32, #tpu.memory_space<vmem>>, vector<1x8x128xf32>
    %143 = vector.shape_cast %142 : vector<1x8x128xf32> to vector<8x128xf32>
    %c7_85 = arith.constant 7 : index
    %c0_86 = arith.constant 0 : index
    %c0_87 = arith.constant 0 : index
    %144 = vector.load %arg5[%c7_85, %c0_86, %c0_87] : memref<8x8x128xf32, #tpu.memory_space<vmem>>, vector<1x8x128xf32>
    %145 = vector.shape_cast %144 : vector<1x8x128xf32> to vector<8x128xf32>
    %146 = vector.broadcast %139 : vector<1x128xf32> to vector<8x128xf32>
    %147 = arith.mulf %146, %143 : vector<8x128xf32>
    %148 = arith.addf %131, %147 : vector<8x128xf32>
    %149 = vector.broadcast %141 : vector<1x128xf32> to vector<8x128xf32>
    %150 = arith.mulf %149, %145 : vector<8x128xf32>
    %151 = arith.subf %148, %150 : vector<8x128xf32>
    %152 = vector.broadcast %139 : vector<1x128xf32> to vector<8x128xf32>
    %153 = arith.mulf %152, %145 : vector<8x128xf32>
    %154 = arith.addf %137, %153 : vector<8x128xf32>
    %155 = vector.broadcast %141 : vector<1x128xf32> to vector<8x128xf32>
    %156 = arith.mulf %155, %143 : vector<8x128xf32>
    %157 = arith.addf %154, %156 : vector<8x128xf32>
    %c0_88 = arith.constant 0 : index
    %c0_89 = arith.constant 0 : index
    %c0_90 = arith.constant 0 : index
    %158 = vector.load %arg6[%c0_88, %c0_89, %c0_90] : memref<1x8x128xf32, #tpu.memory_space<vmem>>, vector<1x8x128xf32>
    %159 = vector.shape_cast %158 : vector<1x8x128xf32> to vector<8x128xf32>
    %160 = vector.shape_cast %151 : vector<8x128xf32> to vector<1x8x128xf32>
    tpu.vector_store %arg6[%c0_88, %c0_89, %c0_90], %160 {strides = array<i32>} : memref<1x8x128xf32, #tpu.memory_space<vmem>>, vector<1x8x128xf32>,
    %c0_91 = arith.constant 0 : index
    %c0_92 = arith.constant 0 : index
    %c0_93 = arith.constant 0 : index
    %161 = vector.load %arg7[%c0_91, %c0_92, %c0_93] : memref<1x8x128xf32, #tpu.memory_space<vmem>>, vector<1x8x128xf32>
    %162 = vector.shape_cast %161 : vector<1x8x128xf32> to vector<8x128xf32>
    %163 = vector.shape_cast %157 : vector<8x128xf32> to vector<1x8x128xf32>
    tpu.vector_store %arg7[%c0_91, %c0_92, %c0_93], %163 {strides = array<i32>} : memref<1x8x128xf32, #tpu.memory_space<vmem>>, vector<1x8x128xf32>,
    return
  }
  func.func @transform_0(%arg0: i32, %arg1: i32) -> (i32, i32, i32) {
    %c0_i32 = arith.constant 0 : i32
    %c0_i32_0 = arith.constant 0 : i32
    return %arg1, %c0_i32, %arg0 : i32, i32, i32
  }
  func.func @transform_1(%arg0: i32, %arg1: i32) -> (i32, i32, i32) {
    %c0_i32 = arith.constant 0 : i32
    %c0_i32_0 = arith.constant 0 : i32
    return %arg1, %c0_i32, %arg0 : i32, i32, i32
  }
  func.func @transform_2(%arg0: i32, %arg1: i32) -> (i32, i32, i32) {
    %c0_i32 = arith.constant 0 : i32
    %c0_i32_0 = arith.constant 0 : i32
    %c0_i32_1 = arith.constant 0 : i32
    return %c0_i32, %c0_i32_0, %arg0 : i32, i32, i32
  }
  func.func @transform_3(%arg0: i32, %arg1: i32) -> (i32, i32, i32) {
    %c0_i32 = arith.constant 0 : i32
    %c0_i32_0 = arith.constant 0 : i32
    %c0_i32_1 = arith.constant 0 : i32
    return %c0_i32, %c0_i32_0, %arg0 : i32, i32, i32
  }
  func.func @transform_4(%arg0: i32, %arg1: i32) -> (i32, i32, i32) {
    %c0_i32 = arith.constant 0 : i32
    %c0_i32_0 = arith.constant 0 : i32
    return %arg1, %c0_i32, %arg0 : i32, i32, i32
  }
  func.func @transform_5(%arg0: i32, %arg1: i32) -> (i32, i32, i32) {
    %c0_i32 = arith.constant 0 : i32
    %c0_i32_0 = arith.constant 0 : i32
    return %arg1, %c0_i32, %arg0 : i32, i32, i32
  }
}

module attributes {stable_mosaic.version = 11 : i64} {
  func.func @_fno_pointwise_kernel(%arg0: i32, %arg1: i32, %arg2: memref<1x8x512xf32, #tpu.memory_space<vmem>>, %arg3: memref<1x8x512xf32, #tpu.memory_space<vmem>>, %arg4: memref<1x2x512xf32, #tpu.memory_space<vmem>>, %arg5: memref<8x8xbf16, #tpu.memory_space<vmem>>, %arg6: memref<8x1xf32, #tpu.memory_space<vmem>>, %arg7: memref<8x18xbf16, #tpu.memory_space<vmem>>, %arg8: memref<8x1xf32, #tpu.memory_space<vmem>>, %arg9: memref<1x8x512xf32, #tpu.memory_space<vmem>>) attributes {dimension_semantics = [#tpu.dimension_semantics<parallel>, #tpu.dimension_semantics<parallel>], iteration_bounds = array<i64: 2, 1>, scalar_prefetch = 0 : i64, scratch_operands = 0 : i64, tpu.core_type = #tpu.core_type<tc>, window_params = [{transform_indices = @transform_0, window_bounds = array<i64: 1, 8, 512>}, {transform_indices = @transform_1, window_bounds = array<i64: 1, 8, 512>}, {transform_indices = @transform_2, window_bounds = array<i64: 1, 2, 512>}, {pipeline_mode = #tpu.pipeline_mode<synchronous>, transform_indices = @transform_3, window_bounds = array<i64: 8, 8>}, {pipeline_mode = #tpu.pipeline_mode<synchronous>, transform_indices = @transform_4, window_bounds = array<i64: 8, 1>}, {pipeline_mode = #tpu.pipeline_mode<synchronous>, transform_indices = @transform_5, window_bounds = array<i64: 8, 18>}, {pipeline_mode = #tpu.pipeline_mode<synchronous>, transform_indices = @transform_6, window_bounds = array<i64: 8, 1>}, {transform_indices = @transform_7, window_bounds = array<i64: 1, 8, 512>}]} {
    %c0 = arith.constant 0 : index
    %c0_0 = arith.constant 0 : index
    %c0_1 = arith.constant 0 : index
    %0 = vector.load %arg2[%c0, %c0_0, %c0_1] : memref<1x8x512xf32, #tpu.memory_space<vmem>>, vector<1x8x512xf32>
    %1 = vector.shape_cast %0 : vector<1x8x512xf32> to vector<8x512xf32>
    %2 = arith.truncf %1 : vector<8x512xf32> to vector<8x512xbf16>
    %c0_2 = arith.constant 0 : index
    %c0_3 = arith.constant 0 : index
    %3 = vector.load %arg5[%c0_2, %c0_3] : memref<8x8xbf16, #tpu.memory_space<vmem>>, vector<8x8xbf16>
    %cst = arith.constant dense<0.000000e+00> : vector<8x512xf32>
    %4 = tpu.matmul %3, %2, %cst {dimension_numbers = #tpu.dot_dimension_numbers<[1], [0], [0], [1], [0, 0, 1, 1], [], []>} : vector<8x8xbf16>, vector<8x512xbf16>, vector<8x512xf32> -> vector<8x512xf32>
    %c0_4 = arith.constant 0 : index
    %c0_5 = arith.constant 0 : index
    %5 = vector.load %arg6[%c0_4, %c0_5] : memref<8x1xf32, #tpu.memory_space<vmem>>, vector<8x1xf32>
    %6 = vector.broadcast %5 : vector<8x1xf32> to vector<8x512xf32>
    %7 = arith.addf %4, %6 : vector<8x512xf32>
    %cst_6 = arith.constant 5.000000e-01 : f32
    %8 = vector.broadcast %cst_6 : f32 to vector<8x512xf32>
    %9 = arith.mulf %8, %7 : vector<8x512xf32>
    %cst_7 = arith.constant 0.707106769 : f32
    %10 = vector.broadcast %cst_7 : f32 to vector<8x512xf32>
    %11 = arith.mulf %7, %10 : vector<8x512xf32>
    %cst_8 = arith.constant -4.000000e+00 : f32
    %cst_9 = arith.constant 4.000000e+00 : f32
    %12 = vector.broadcast %cst_8 : f32 to vector<8x512xf32>
    %13 = arith.maximumf %12, %11 : vector<8x512xf32>
    %14 = vector.broadcast %cst_9 : f32 to vector<8x512xf32>
    %15 = arith.minimumf %14, %13 : vector<8x512xf32>
    %16 = arith.mulf %15, %15 : vector<8x512xf32>
    %cst_10 = arith.constant -2.72614237E-10 : f32
    %17 = vector.broadcast %cst_10 : f32 to vector<8x512xf32>
    %18 = arith.mulf %16, %17 : vector<8x512xf32>
    %cst_11 = arith.constant 2.77068146E-8 : f32
    %19 = vector.broadcast %cst_11 : f32 to vector<8x512xf32>
    %20 = arith.addf %18, %19 : vector<8x512xf32>
    %21 = arith.mulf %16, %20 : vector<8x512xf32>
    %cst_12 = arith.constant -2.10102394E-6 : f32
    %22 = vector.broadcast %cst_12 : f32 to vector<8x512xf32>
    %23 = arith.addf %21, %22 : vector<8x512xf32>
    %24 = arith.mulf %16, %23 : vector<8x512xf32>
    %cst_13 = arith.constant -5.69250624E-5 : f32
    %25 = vector.broadcast %cst_13 : f32 to vector<8x512xf32>
    %26 = arith.addf %24, %25 : vector<8x512xf32>
    %27 = arith.mulf %16, %26 : vector<8x512xf32>
    %cst_14 = arith.constant -7.34990637E-4 : f32
    %28 = vector.broadcast %cst_14 : f32 to vector<8x512xf32>
    %29 = arith.addf %27, %28 : vector<8x512xf32>
    %30 = arith.mulf %16, %29 : vector<8x512xf32>
    %cst_15 = arith.constant -2.954600e-03 : f32
    %31 = vector.broadcast %cst_15 : f32 to vector<8x512xf32>
    %32 = arith.addf %30, %31 : vector<8x512xf32>
    %33 = arith.mulf %16, %32 : vector<8x512xf32>
    %cst_16 = arith.constant -0.0160960332 : f32
    %34 = vector.broadcast %cst_16 : f32 to vector<8x512xf32>
    %35 = arith.addf %33, %34 : vector<8x512xf32>
    %36 = arith.mulf %35, %15 : vector<8x512xf32>
    %cst_17 = arith.constant -1.45660715E-5 : f32
    %37 = vector.broadcast %cst_17 : f32 to vector<8x512xf32>
    %38 = arith.mulf %16, %37 : vector<8x512xf32>
    %cst_18 = arith.constant -2.13374049E-4 : f32
    %39 = vector.broadcast %cst_18 : f32 to vector<8x512xf32>
    %40 = arith.addf %38, %39 : vector<8x512xf32>
    %41 = arith.mulf %16, %40 : vector<8x512xf32>
    %cst_19 = arith.constant -0.00168282702 : f32
    %42 = vector.broadcast %cst_19 : f32 to vector<8x512xf32>
    %43 = arith.addf %41, %42 : vector<8x512xf32>
    %44 = arith.mulf %16, %43 : vector<8x512xf32>
    %cst_20 = arith.constant -0.00737332925 : f32
    %45 = vector.broadcast %cst_20 : f32 to vector<8x512xf32>
    %46 = arith.addf %44, %45 : vector<8x512xf32>
    %47 = arith.mulf %16, %46 : vector<8x512xf32>
    %cst_21 = arith.constant -0.0142647391 : f32
    %48 = vector.broadcast %cst_21 : f32 to vector<8x512xf32>
    %49 = arith.addf %47, %48 : vector<8x512xf32>
    %50 = tpu.reciprocal %49 {approx = true} : vector<8x512xf32> -> vector<8x512xf32>
    %51 = arith.mulf %49, %50 : vector<8x512xf32>
    %cst_22 = arith.constant 2.000000e+00 : f32
    %52 = vector.broadcast %cst_22 : f32 to vector<8x512xf32>
    %53 = arith.subf %52, %51 : vector<8x512xf32>
    %54 = arith.mulf %50, %53 : vector<8x512xf32>
    %55 = arith.mulf %36, %54 : vector<8x512xf32>
    %cst_23 = arith.constant 1.000000e+00 : f32
    %56 = vector.broadcast %cst_23 : f32 to vector<8x512xf32>
    %57 = arith.addf %56, %55 : vector<8x512xf32>
    %58 = arith.mulf %9, %57 : vector<8x512xf32>
    %c0_24 = arith.constant 0 : index
    %c0_25 = arith.constant 0 : index
    %c0_26 = arith.constant 0 : index
    %59 = vector.load %arg3[%c0_24, %c0_25, %c0_26] : memref<1x8x512xf32, #tpu.memory_space<vmem>>, vector<1x8x512xf32>
    %60 = vector.shape_cast %59 : vector<1x8x512xf32> to vector<8x512xf32>
    %c0_27 = arith.constant 0 : index
    %c0_28 = arith.constant 0 : index
    %c0_29 = arith.constant 0 : index
    %61 = vector.load %arg4[%c0_27, %c0_28, %c0_29] : memref<1x2x512xf32, #tpu.memory_space<vmem>>, vector<1x2x512xf32>
    %62 = vector.shape_cast %61 : vector<1x2x512xf32> to vector<2x512xf32>
    %63 = tpu.concatenate %58, %60, %62 in 0 : vector<8x512xf32>, vector<8x512xf32>, vector<2x512xf32> -> vector<18x512xf32>
    %64 = arith.truncf %63 : vector<18x512xf32> to vector<18x512xbf16>
    %c0_30 = arith.constant 0 : index
    %c0_31 = arith.constant 0 : index
    %65 = vector.load %arg7[%c0_30, %c0_31] : memref<8x18xbf16, #tpu.memory_space<vmem>>, vector<8x18xbf16>
    %cst_32 = arith.constant dense<0.000000e+00> : vector<8x512xf32>
    %66 = tpu.matmul %65, %64, %cst_32 {dimension_numbers = #tpu.dot_dimension_numbers<[1], [0], [0], [1], [0, 0, 1, 1], [], []>} : vector<8x18xbf16>, vector<18x512xbf16>, vector<8x512xf32> -> vector<8x512xf32>
    %c0_33 = arith.constant 0 : index
    %c0_34 = arith.constant 0 : index
    %67 = vector.load %arg8[%c0_33, %c0_34] : memref<8x1xf32, #tpu.memory_space<vmem>>, vector<8x1xf32>
    %68 = vector.broadcast %67 : vector<8x1xf32> to vector<8x512xf32>
    %69 = arith.addf %66, %68 : vector<8x512xf32>
    %cst_35 = arith.constant 5.000000e-01 : f32
    %70 = vector.broadcast %cst_35 : f32 to vector<8x512xf32>
    %71 = arith.mulf %70, %69 : vector<8x512xf32>
    %cst_36 = arith.constant 0.707106769 : f32
    %72 = vector.broadcast %cst_36 : f32 to vector<8x512xf32>
    %73 = arith.mulf %69, %72 : vector<8x512xf32>
    %cst_37 = arith.constant -4.000000e+00 : f32
    %cst_38 = arith.constant 4.000000e+00 : f32
    %74 = vector.broadcast %cst_37 : f32 to vector<8x512xf32>
    %75 = arith.maximumf %74, %73 : vector<8x512xf32>
    %76 = vector.broadcast %cst_38 : f32 to vector<8x512xf32>
    %77 = arith.minimumf %76, %75 : vector<8x512xf32>
    %78 = arith.mulf %77, %77 : vector<8x512xf32>
    %cst_39 = arith.constant -2.72614237E-10 : f32
    %79 = vector.broadcast %cst_39 : f32 to vector<8x512xf32>
    %80 = arith.mulf %78, %79 : vector<8x512xf32>
    %cst_40 = arith.constant 2.77068146E-8 : f32
    %81 = vector.broadcast %cst_40 : f32 to vector<8x512xf32>
    %82 = arith.addf %80, %81 : vector<8x512xf32>
    %83 = arith.mulf %78, %82 : vector<8x512xf32>
    %cst_41 = arith.constant -2.10102394E-6 : f32
    %84 = vector.broadcast %cst_41 : f32 to vector<8x512xf32>
    %85 = arith.addf %83, %84 : vector<8x512xf32>
    %86 = arith.mulf %78, %85 : vector<8x512xf32>
    %cst_42 = arith.constant -5.69250624E-5 : f32
    %87 = vector.broadcast %cst_42 : f32 to vector<8x512xf32>
    %88 = arith.addf %86, %87 : vector<8x512xf32>
    %89 = arith.mulf %78, %88 : vector<8x512xf32>
    %cst_43 = arith.constant -7.34990637E-4 : f32
    %90 = vector.broadcast %cst_43 : f32 to vector<8x512xf32>
    %91 = arith.addf %89, %90 : vector<8x512xf32>
    %92 = arith.mulf %78, %91 : vector<8x512xf32>
    %cst_44 = arith.constant -2.954600e-03 : f32
    %93 = vector.broadcast %cst_44 : f32 to vector<8x512xf32>
    %94 = arith.addf %92, %93 : vector<8x512xf32>
    %95 = arith.mulf %78, %94 : vector<8x512xf32>
    %cst_45 = arith.constant -0.0160960332 : f32
    %96 = vector.broadcast %cst_45 : f32 to vector<8x512xf32>
    %97 = arith.addf %95, %96 : vector<8x512xf32>
    %98 = arith.mulf %97, %77 : vector<8x512xf32>
    %cst_46 = arith.constant -1.45660715E-5 : f32
    %99 = vector.broadcast %cst_46 : f32 to vector<8x512xf32>
    %100 = arith.mulf %78, %99 : vector<8x512xf32>
    %cst_47 = arith.constant -2.13374049E-4 : f32
    %101 = vector.broadcast %cst_47 : f32 to vector<8x512xf32>
    %102 = arith.addf %100, %101 : vector<8x512xf32>
    %103 = arith.mulf %78, %102 : vector<8x512xf32>
    %cst_48 = arith.constant -0.00168282702 : f32
    %104 = vector.broadcast %cst_48 : f32 to vector<8x512xf32>
    %105 = arith.addf %103, %104 : vector<8x512xf32>
    %106 = arith.mulf %78, %105 : vector<8x512xf32>
    %cst_49 = arith.constant -0.00737332925 : f32
    %107 = vector.broadcast %cst_49 : f32 to vector<8x512xf32>
    %108 = arith.addf %106, %107 : vector<8x512xf32>
    %109 = arith.mulf %78, %108 : vector<8x512xf32>
    %cst_50 = arith.constant -0.0142647391 : f32
    %110 = vector.broadcast %cst_50 : f32 to vector<8x512xf32>
    %111 = arith.addf %109, %110 : vector<8x512xf32>
    %112 = tpu.reciprocal %111 {approx = true} : vector<8x512xf32> -> vector<8x512xf32>
    %113 = arith.mulf %111, %112 : vector<8x512xf32>
    %cst_51 = arith.constant 2.000000e+00 : f32
    %114 = vector.broadcast %cst_51 : f32 to vector<8x512xf32>
    %115 = arith.subf %114, %113 : vector<8x512xf32>
    %116 = arith.mulf %112, %115 : vector<8x512xf32>
    %117 = arith.mulf %98, %116 : vector<8x512xf32>
    %cst_52 = arith.constant 1.000000e+00 : f32
    %118 = vector.broadcast %cst_52 : f32 to vector<8x512xf32>
    %119 = arith.addf %118, %117 : vector<8x512xf32>
    %120 = arith.mulf %71, %119 : vector<8x512xf32>
    %c0_53 = arith.constant 0 : index
    %c0_54 = arith.constant 0 : index
    %c0_55 = arith.constant 0 : index
    %121 = vector.load %arg9[%c0_53, %c0_54, %c0_55] : memref<1x8x512xf32, #tpu.memory_space<vmem>>, vector<1x8x512xf32>
    %122 = vector.shape_cast %121 : vector<1x8x512xf32> to vector<8x512xf32>
    %123 = vector.shape_cast %120 : vector<8x512xf32> to vector<1x8x512xf32>
    tpu.vector_store %arg9[%c0_53, %c0_54, %c0_55], %123 {strides = array<i32>} : memref<1x8x512xf32, #tpu.memory_space<vmem>>, vector<1x8x512xf32>,
    return
  }
  func.func @transform_0(%arg0: i32, %arg1: i32) -> (i32, i32, i32) {
    %c0_i32 = arith.constant 0 : i32
    %c0_i32_0 = arith.constant 0 : i32
    return %arg0, %c0_i32, %arg1 : i32, i32, i32
  }
  func.func @transform_1(%arg0: i32, %arg1: i32) -> (i32, i32, i32) {
    %c0_i32 = arith.constant 0 : i32
    %c0_i32_0 = arith.constant 0 : i32
    return %arg0, %c0_i32, %arg1 : i32, i32, i32
  }
  func.func @transform_2(%arg0: i32, %arg1: i32) -> (i32, i32, i32) {
    %c0_i32 = arith.constant 0 : i32
    %c0_i32_0 = arith.constant 0 : i32
    return %arg0, %c0_i32, %arg1 : i32, i32, i32
  }
  func.func @transform_3(%arg0: i32, %arg1: i32) -> (i32, i32) {
    %c0_i32 = arith.constant 0 : i32
    %c0_i32_0 = arith.constant 0 : i32
    %c0_i32_1 = arith.constant 0 : i32
    return %c0_i32, %c0_i32_0 : i32, i32
  }
  func.func @transform_4(%arg0: i32, %arg1: i32) -> (i32, i32) {
    %c0_i32 = arith.constant 0 : i32
    %c0_i32_0 = arith.constant 0 : i32
    %c0_i32_1 = arith.constant 0 : i32
    return %c0_i32, %c0_i32_0 : i32, i32
  }
  func.func @transform_5(%arg0: i32, %arg1: i32) -> (i32, i32) {
    %c0_i32 = arith.constant 0 : i32
    %c0_i32_0 = arith.constant 0 : i32
    %c0_i32_1 = arith.constant 0 : i32
    return %c0_i32, %c0_i32_0 : i32, i32
  }
  func.func @transform_6(%arg0: i32, %arg1: i32) -> (i32, i32) {
    %c0_i32 = arith.constant 0 : i32
    %c0_i32_0 = arith.constant 0 : i32
    %c0_i32_1 = arith.constant 0 : i32
    return %c0_i32, %c0_i32_0 : i32, i32
  }
  func.func @transform_7(%arg0: i32, %arg1: i32) -> (i32, i32, i32) {
    %c0_i32 = arith.constant 0 : i32
    %c0_i32_0 = arith.constant 0 : i32
    return %arg0, %c0_i32, %arg1 : i32, i32, i32
  }
}

</mosaic_0001>

<llo_original>
// kernel: _lambda_.2
$region0: #{_lambda_.2}
  #allocation0 [shape = 'u32[]', space=smem, size = 0x4, offset = 0x4, fixed_abs, tag = 'smem constant byte address 0x4 - core index']
  #allocation1 [shape = 'u32[72,128]{1,0:T(1,128)}', space=vmem, size = 0x9000, scoped, tag = 'internal scratch']
  %s0 = inlined_call_operand.vmem [shape: f32[2,8,128], index: 0, kind: input, shape index: {}]
  %s1 = inlined_call_operand.vmem [shape: f32[2,8,128], index: 1, kind: input, shape index: {}]
  %s2 = inlined_call_operand.vmem [shape: f32[8,8,128], index: 2, kind: input, shape index: {}]
  %s3 = inlined_call_operand.vmem [shape: f32[8,8,128], index: 3, kind: input, shape index: {}]
  %s4 = inlined_call_operand.vmem [shape: f32[2,8,128], index: 4, kind: output, shape index: {0}]
  %s5 = inlined_call_operand.vmem [shape: f32[2,8,128], index: 5, kind: output, shape index: {1}]
  %6 = xla_tuple %s4, %s5
  %s7 = sld [smem:[#allocation0]]
  $region57: #{_lambda_.2} parent=0
    _
  %s9 = ssub.s32 1, %s7
  %s10 = scalar_select 0, %s9, %s7
  loop: start=0, step=1, limit=4
  $region2: #{_lambda_.2} parent=0 // loop_pre_header
    _
  $region3: #{_lambda_.2} parent=0 // loop_header
    %s12 = sphi 0, %s16
    %p13 = scmp.ge.s32.totalorder %s12, 4
    %s19 = sphi 0, %s31
    %s20 = sphi 0, %s27
    %s21 = sphi 0, %s19
    %s22 = sphi 0, %s20
    %s23 = sphi 0, %s21
    %s24 = sphi 0, %s22
    %s36 = sphi 0, %s38
    %s39 = sphi 0, %s36
    %s40 = sphi 0, %s39
    %s56 = sphi 0, %s40
    %s64 = sphi 0, %s66
    %s67 = sphi 0, %s64
    %s68 = sphi 0, %s67
    %s84 = sphi 0, %s68
    %s90 = sphi 0, %s92
    %s93 = sphi 0, %s90
    %s94 = sphi 0, %s93
    %s110 = sphi 0, %s94
    %s116 = sphi 0, %s118
    %s119 = sphi 0, %s116
    %s120 = sphi 0, %s119
    %s136 = sphi 0, %s120
    %s144 = sphi 0, %s146
    %s147 = sphi 0, %s144
    %s148 = sphi 0, %s147
    %s164 = sphi 0, %s148
    %s172 = sphi 0, %s174
    %s175 = sphi 0, %s172
    %s176 = sphi 0, %s175
    %s192 = sphi 0, %s176
  $region4: #{_lambda_.2} parent=0 // loop_header_branch
    %15 = sbr.rel (%p13) target = $region8
  $region5: #{_lambda_.2} parent=0 // loop_body
    %s17 = ssub.s32 %s12, 1
    %s18 = ssub.s32 %s12, 2
    %s25 = sadd.s32 1, %s20
    %p26 = scmp.ge.s32.totalorder %s25, 2
    %s27 = scalar_select %p26, 0, %s25
    %s28 = sadd.s32 1, %s19
    %s29 = scalar_select %p26, %s28, %s19
    %p30 = scmp.ge.s32.totalorder %s29, 1
    %s31 = scalar_select %p30, 0, %s29
    %s32 = ssub.s32 %s20, %s27
    %s33 = ssub.s32 %s19, %s31
    %s34 = sor.u32 %s32, %s33
    %p35 = scmp.eq.s32.totalorder %s34, 0
    %s37 = sadd.s32 %s36, 1
    %s38 = scalar_select %p35, %s36, %s37
    %p41 = pneg %p35
    %p42 = scmp.eq.s32.totalorder %s12, 1
    %p43 = por %p41, %p42
    %p44 = scmp.ne.s32.totalorder %s36, %s39
    %p45 = scmp.eq.s32.totalorder %s12, 0
    %p46 = por %p44, %p45
    %p47 = scmp.ne.s32.totalorder %s36, %s39
    %p48 = scmp.eq.s32.totalorder %s17, 1
    %p49 = por %p47, %p48
    %p50 = scmp.ne.s32.totalorder %s39, %s40
    %p51 = scmp.eq.s32.totalorder %s17, 0
    %p52 = por %p50, %p51
    %p53 = scmp.ne.s32.totalorder %s39, %s40
    %p54 = scmp.eq.s32.totalorder %s18, 1
    %p55 = por %p53, %p54
    %p57 = scmp.ne.s32.totalorder %s40, %s56
    %p58 = scmp.eq.s32.totalorder %s18, 0
    %p59 = por %p57, %p58
    %s60 = ssub.s32 %s20, %s27
    %s61 = ssub.s32 %s19, %s31
    %s62 = sor.u32 %s60, %s61
    %p63 = scmp.eq.s32.totalorder %s62, 0
    %s65 = sadd.s32 %s64, 1
    %s66 = scalar_select %p63, %s64, %s65
    %p69 = pneg %p63
    %p70 = scmp.eq.s32.totalorder %s12, 1
    %p71 = por %p69, %p70
    %p72 = scmp.ne.s32.totalorder %s64, %s67
    %p73 = scmp.eq.s32.totalorder %s12, 0
    %p74 = por %p72, %p73
    %p75 = scmp.ne.s32.totalorder %s64, %s67
    %p76 = scmp.eq.s32.totalorder %s17, 1
    %p77 = por %p75, %p76
    %p78 = scmp.ne.s32.totalorder %s67, %s68
    %p79 = scmp.eq.s32.totalorder %s17, 0
    %p80 = por %p78, %p79
    %p81 = scmp.ne.s32.totalorder %s67, %s68
    %p82 = scmp.eq.s32.totalorder %s18, 1
    %p83 = por %p81, %p82
    %p85 = scmp.ne.s32.totalorder %s68, %s84
    %p86 = scmp.eq.s32.totalorder %s18, 0
    %p87 = por %p85, %p86
    %s88 = ssub.s32 %s19, %s31
    %p89 = scmp.eq.s32.totalorder %s88, 0
    %s91 = sadd.s32 %s90, 1
    %s92 = scalar_select %p89, %s90, %s91
    %p95 = pneg %p89
    %p96 = scmp.eq.s32.totalorder %s12, 1
    %p97 = por %p95, %p96
    %p98 = scmp.ne.s32.totalorder %s90, %s93
    %p99 = scmp.eq.s32.totalorder %s12, 0
    %p100 = por %p98, %p99
    %p101 = scmp.ne.s32.totalorder %s90, %s93
    %p102 = scmp.eq.s32.totalorder %s17, 1
    %p103 = por %p101, %p102
    %p104 = scmp.ne.s32.totalorder %s93, %s94
    %p105 = scmp.eq.s32.totalorder %s17, 0
    %p106 = por %p104, %p105
    %p107 = scmp.ne.s32.totalorder %s93, %s94
    %p108 = scmp.eq.s32.totalorder %s18, 1
    %p109 = por %p107, %p108
    %p111 = scmp.ne.s32.totalorder %s94, %s110
    %p112 = scmp.eq.s32.totalorder %s18, 0
    %p113 = por %p111, %p112
    %s114 = ssub.s32 %s19, %s31
    %p115 = scmp.eq.s32.totalorder %s114, 0
    %s117 = sadd.s32 %s116, 1
    %s118 = scalar_select %p115, %s116, %s117
    %p121 = pneg %p115
    %p122 = scmp.eq.s32.totalorder %s12, 1
    %p123 = por %p121, %p122
    %p124 = scmp.ne.s32.totalorder %s116, %s119
    %p125 = scmp.eq.s32.totalorder %s12, 0
    %p126 = por %p124, %p125
    %p127 = scmp.ne.s32.totalorder %s116, %s119
    %p128 = scmp.eq.s32.totalorder %s17, 1
    %p129 = por %p127, %p128
    %p130 = scmp.ne.s32.totalorder %s119, %s120
    %p131 = scmp.eq.s32.totalorder %s17, 0
    %p132 = por %p130, %p131
    %p133 = scmp.ne.s32.totalorder %s119, %s120
    %p134 = scmp.eq.s32.totalorder %s18, 1
    %p135 = por %p133, %p134
    %p137 = scmp.ne.s32.totalorder %s120, %s136
    %p138 = scmp.eq.s32.totalorder %s18, 0
    %p139 = por %p137, %p138
    %s140 = ssub.s32 %s20, %s27
    %s141 = ssub.s32 %s19, %s31
    %s142 = sor.u32 %s140, %s141
    %p143 = scmp.eq.s32.totalorder %s142, 0
    %s145 = sadd.s32 %s144, 1
    %s146 = scalar_select %p143, %s144, %s145
    %p149 = pneg %p143
    %p150 = scmp.eq.s32.totalorder %s12, 1
    %p151 = por %p149, %p150
    %p152 = scmp.ne.s32.totalorder %s144, %s147
    %p153 = scmp.eq.s32.totalorder %s12, 0
    %p154 = por %p152, %p153
    %p155 = scmp.ne.s32.totalorder %s144, %s147
    %p156 = scmp.eq.s32.totalorder %s17, 1
    %p157 = por %p155, %p156
    %p158 = scmp.ne.s32.totalorder %s147, %s148
    %p159 = scmp.eq.s32.totalorder %s17, 0
    %p160 = por %p158, %p159
    %p161 = scmp.ne.s32.totalorder %s147, %s148
    %p162 = scmp.eq.s32.totalorder %s18, 1
    %p163 = por %p161, %p162
    %p165 = scmp.ne.s32.totalorder %s148, %s164
    %p166 = scmp.eq.s32.totalorder %s18, 0
    %p167 = por %p165, %p166
    %s168 = ssub.s32 %s20, %s27
    %s169 = ssub.s32 %s19, %s31
    %s170 = sor.u32 %s168, %s169
    %p171 = scmp.eq.s32.totalorder %s170, 0
    %s173 = sadd.s32 %s172, 1
    %s174 = scalar_select %p171, %s172, %s173
    %p177 = pneg %p171
    %p178 = scmp.eq.s32.totalorder %s12, 1
    %p179 = por %p177, %p178
    %p180 = scmp.ne.s32.totalorder %s172, %s175
    %p181 = scmp.eq.s32.totalorder %s12, 0
    %p182 = por %p180, %p181
    %p183 = scmp.ne.s32.totalorder %s172, %s175
    %p184 = scmp.eq.s32.totalorder %s17, 1
    %p185 = por %p183, %p184
    %p186 = scmp.ne.s32.totalorder %s175, %s176
    %p187 = scmp.eq.s32.totalorder %s17, 0
    %p188 = por %p186, %p187
    %p189 = scmp.ne.s32.totalorder %s175, %s176
    %p190 = scmp.eq.s32.totalorder %s18, 1
    %p191 = por %p189, %p190
    %p193 = scmp.ne.s32.totalorder %s176, %s192
    %p194 = scmp.eq.s32.totalorder %s18, 0
    %p195 = por %p193, %p194
    %p196 = scmp.le.s32.totalorder 1, %s12
    %p197 = scmp.lt.s32.totalorder %s12, 3
    %p198 = pnand %p196, %p197
    %p199 = pneg %p198
    // Predicated region
    $region9: #{_lambda_.2} parent=5 // pred_check
      _
    $region10: #{_lambda_.2} parent=5 // pred_check_branch
      %201 = sbr.rel (%p198) target = $region12
    $region11: #{_lambda_.2} parent=5 // pred_region
      %s202 = ssub.s32 %s12, 1
      // Predicated region
      $region13: #{_lambda_.2} parent=11 // pred_check
        %p203 = pneg %p106
      $region14: #{_lambda_.2} parent=11 // pred_check_branch
        %205 = sbr.rel (%p203) target = $region16
      $region15: #{_lambda_.2} parent=11 // pred_region
        %p206 = scmp.lt.s32.totalorder %s21, 0
        %s207 = scalar_select %p206, %s21, 0
        %s208 = smul.addr %s207, 8
        %s209 = scalar_lea.vmem %s2, %s208
      $region16: #{_lambda_.2} parent=11 // pred_fallthru
        _
      // Predicated region
      $region17: #{_lambda_.2} parent=11 // pred_check
        %p210 = pneg %p132
      $region18: #{_lambda_.2} parent=11 // pred_check_branch
        %212 = sbr.rel (%p210) target = $region20
      $region19: #{_lambda_.2} parent=11 // pred_region
        %p213 = scmp.lt.s32.totalorder %s21, 0
        %s214 = scalar_select %p213, %s21, 0
        %s215 = smul.addr %s214, 8
        %s216 = scalar_lea.vmem %s3, %s215
      $region20: #{_lambda_.2} parent=11 // pred_fallthru
        _
    $region12: #{_lambda_.2} parent=5 // pred_fallthru
      _
    %p217 = scmp.lt.s32.totalorder %s12, 2
    // Predicated region
    $region21: #{_lambda_.2} parent=5 // pred_check
      %p218 = pneg %p217
    $region22: #{_lambda_.2} parent=5 // pred_check_branch
      %220 = sbr.rel (%p218) target = $region24
    $region23: #{_lambda_.2} parent=5 // pred_region
      // Predicated region
      $region25: #{_lambda_.2} parent=23 // pred_check
        %p221 = pneg %p46
      $region26: #{_lambda_.2} parent=23 // pred_check_branch
        %223 = sbr.rel (%p221) target = $region28
      $region27: #{_lambda_.2} parent=23 // pred_region
        %p224 = scmp.lt.s32.totalorder %s20, 1
        %s225 = scalar_select %p224, %s20, 1
        %p226 = scmp.lt.s32.totalorder %s19, 0
        %s227 = scalar_select %p226, %s19, 0
        %s228 = sadd.s32 %s227, %s225
        %s229 = smul.addr %s228, 8
        %s230 = scalar_lea.vmem %s0, %s229
      $region28: #{_lambda_.2} parent=23 // pred_fallthru
        _
      // Predicated region
      $region29: #{_lambda_.2} parent=23 // pred_check
        %p231 = pneg %p74
      $region30: #{_lambda_.2} parent=23 // pred_check_branch
        %233 = sbr.rel (%p231) target = $region32
      $region31: #{_lambda_.2} parent=23 // pred_region
        %p234 = scmp.lt.s32.totalorder %s20, 1
        %s235 = scalar_select %p234, %s20, 1
        %p236 = scmp.lt.s32.totalorder %s19, 0
        %s237 = scalar_select %p236, %s19, 0
        %s238 = sadd.s32 %s237, %s235
        %s239 = smul.addr %s238, 8
        %s240 = scalar_lea.vmem %s1, %s239
      $region32: #{_lambda_.2} parent=23 // pred_fallthru
        _
    $region24: #{_lambda_.2} parent=5 // pred_fallthru
      _
    %p241 = scmp.le.s32.totalorder 1, %s12
    %p242 = scmp.lt.s32.totalorder %s12, 3
    %p243 = pnand %p241, %p242
    %p244 = pneg %p243
    // Predicated region
    $region33: #{_lambda_.2} parent=5 // pred_check
      _
    $region34: #{_lambda_.2} parent=5 // pred_check_branch
      %246 = sbr.rel (%p243) target = $region36
    $region35: #{_lambda_.2} parent=5 // pred_region
      %s247 = ssub.s32 %s12, 1
      %p248 = scmp.lt.s32.totalorder %s22, 1
      %s249 = scalar_select %p248, %s22, 1
      %p250 = scmp.lt.s32.totalorder %s21, 0
      %s251 = scalar_select %p250, %s21, 0
      %s252 = sadd.s32 %s251, %s249
      %s253 = smul.addr %s252, 8
      %s254 = scalar_lea.vmem %s0, %s253
      %p255 = pneg %p52
      %p256 = pneg %p49
      %p257 = scmp.lt.s32.totalorder %s22, 1
      %s258 = scalar_select %p257, %s22, 1
      %p259 = scmp.lt.s32.totalorder %s21, 0
      %s260 = scalar_select %p259, %s21, 0
      %s261 = sadd.s32 %s260, %s258
      %s262 = smul.addr %s261, 8
      %s263 = scalar_lea.vmem %s1, %s262
      %p264 = pneg %p80
      %p265 = pneg %p77
      %p266 = scmp.lt.s32.totalorder %s21, 0
      %s267 = scalar_select %p266, %s21, 0
      %s268 = smul.addr %s267, 8
      %s269 = scalar_lea.vmem %s2, %s268
      %p270 = pneg %p106
      %p271 = pneg %p103
      %p272 = scmp.lt.s32.totalorder %s21, 0
      %s273 = scalar_select %p272, %s21, 0
      %s274 = smul.addr %s273, 8
      %s275 = scalar_lea.vmem %s3, %s274
      %p276 = pneg %p132
      %p277 = pneg %p129
      %p278 = pneg %p160
      %p279 = pneg %p157
      %p280 = scmp.lt.s32.totalorder %s22, 1
      %s281 = scalar_select %p280, %s22, 1
      %p282 = scmp.lt.s32.totalorder %s21, 0
      %s283 = scalar_select %p282, %s21, 0
      %s284 = sadd.s32 %s283, %s281
      %s285 = smul.addr %s284, 8
      %s286 = scalar_lea.vmem %s4, %s285
      %p287 = pneg %p188
      %p288 = pneg %p185
      %p289 = scmp.lt.s32.totalorder %s22, 1
      %s290 = scalar_select %p289, %s22, 1
      %p291 = scmp.lt.s32.totalorder %s21, 0
      %s292 = scalar_select %p291, %s21, 0
      %s293 = sadd.s32 %s292, %s290
      %s294 = smul.addr %s293, 8
      %s295 = scalar_lea.vmem %s5, %s294
      %p296 = scmp.lt.s32.totalorder %s22, 1
      %s297 = scalar_select %p296, %s22, 1
      %p298 = scmp.lt.s32.totalorder %s21, 0
      %s299 = scalar_select %p298, %s21, 0
      %s300 = sadd.s32 %s299, %s297
      %s301 = smul.addr %s300, 8
      %s302 = scalar_lea.vmem %s0, %s301
      %p303 = scmp.lt.s32.totalorder %s22, 1
      %s304 = scalar_select %p303, %s22, 1
      %p305 = scmp.lt.s32.totalorder %s21, 0
      %s306 = scalar_select %p305, %s21, 0
      %s307 = sadd.s32 %s306, %s304
      %s308 = smul.addr %s307, 8
      %s309 = scalar_lea.vmem %s1, %s308
      %p310 = scmp.lt.s32.totalorder %s21, 0
      %s311 = scalar_select %p310, %s21, 0
      %s312 = smul.addr %s311, 8
      %s313 = scalar_lea.vmem %s2, %s312
      %p314 = scmp.lt.s32.totalorder %s21, 0
      %s315 = scalar_select %p314, %s21, 0
      %s316 = smul.addr %s315, 8
      %s317 = scalar_lea.vmem %s3, %s316
      %p318 = scmp.lt.s32.totalorder %s22, 1
      %s319 = scalar_select %p318, %s22, 1
      %p320 = scmp.lt.s32.totalorder %s21, 0
      %s321 = scalar_select %p320, %s21, 0
      %s322 = sadd.s32 %s321, %s319
      %s323 = smul.addr %s322, 8
      %s324 = scalar_lea.vmem %s4, %s323
      %p325 = scmp.lt.s32.totalorder %s22, 1
      %s326 = scalar_select %p325, %s22, 1
      %p327 = scmp.lt.s32.totalorder %s21, 0
      %s328 = scalar_select %p327, %s21, 0
      %s329 = sadd.s32 %s328, %s326
      %s330 = smul.addr %s329, 8
      %s331 = scalar_lea.vmem %s5, %s330
      %v332 = vld [vmem:[%s302] sm:$0x1]
      %v333 = vld [vmem:[%s309] sm:$0x1]
      %v334 = vld [vmem:[%s313] sm:$0xff]
      %v335 = vld [vmem:[%s317] sm:$0xff]
      %v336 = vperm.slane %v332, 0
      %v337 = vmul.f32 %v336, %v334
      %v338 = vperm.slane %v333, 0
      %v339 = vmul.f32 %v338, %v335
      %v340 = vsub.f32 %v337, %v339
      %v341 = vmul.f32 %v336, %v335
      %v342 = vmul.f32 %v338, %v334
      %v343 = vadd.f32 %v341, %v342
      %v344 = vld [vmem:[%s302 + $0x1] sm:$0x1]
      %v345 = vld [vmem:[%s309 + $0x1] sm:$0x1]
      %s346 = scalar_lea.vmem %s313, 8
      %v347 = vld [vmem:[%s346] sm:$0xff]
      %s348 = scalar_lea.vmem %s317, 8
      %v349 = vld [vmem:[%s348] sm:$0xff]
      %v350 = vperm.slane %v344, 0
      %v351 = vmul.f32 %v350, %v347
      %v352 = vadd.f32 %v340, %v351
      %v353 = vperm.slane %v345, 0
      %v354 = vmul.f32 %v353, %v349
      %v355 = vsub.f32 %v352, %v354
      %v356 = vmul.f32 %v350, %v349
      %v357 = vadd.f32 %v343, %v356
      %v358 = vmul.f32 %v353, %v347
      %v359 = vadd.f32 %v357, %v358
      %v360 = vld [vmem:[%s302 + $0x2] sm:$0x1]
      %v361 = vld [vmem:[%s309 + $0x2] sm:$0x1]
      %s362 = scalar_lea.vmem %s313, 16
      %v363 = vld [vmem:[%s362] sm:$0xff]
      %s364 = scalar_lea.vmem %s317, 16
      %v365 = vld [vmem:[%s364] sm:$0xff]
      %v366 = vperm.slane %v360, 0
      %v367 = vmul.f32 %v366, %v363
      %v368 = vadd.f32 %v355, %v367
      %v369 = vperm.slane %v361, 0
      %v370 = vmul.f32 %v369, %v365
      %v371 = vsub.f32 %v368, %v370
      %v372 = vmul.f32 %v366, %v365
      %v373 = vadd.f32 %v359, %v372
      %v374 = vmul.f32 %v369, %v363
      %v375 = vadd.f32 %v373, %v374
      %v376 = vld [vmem:[%s302 + $0x3] sm:$0x1]
      %v377 = vld [vmem:[%s309 + $0x3] sm:$0x1]
      %s378 = scalar_lea.vmem %s313, 24
      %v379 = vld [vmem:[%s378] sm:$0xff]
      %s380 = scalar_lea.vmem %s317, 24
      %v381 = vld [vmem:[%s380] sm:$0xff]
      %v382 = vperm.slane %v376, 0
      %v383 = vmul.f32 %v382, %v379
      %v384 = vadd.f32 %v371, %v383
      %v385 = vperm.slane %v377, 0
      %v386 = vmul.f32 %v385, %v381
      %v387 = vsub.f32 %v384, %v386
      %v388 = vmul.f32 %v382, %v381
      %v389 = vadd.f32 %v375, %v388
      %v390 = vmul.f32 %v385, %v379
      %v391 = vadd.f32 %v389, %v390
      %v392 = vld [vmem:[%s302 + $0x4] sm:$0x1]
      %v393 = vld [vmem:[%s309 + $0x4] sm:$0x1]
      %s394 = scalar_lea.vmem %s313, 32
      %v395 = vld [vmem:[%s394] sm:$0xff]
      %s396 = scalar_lea.vmem %s317, 32
      %v397 = vld [vmem:[%s396] sm:$0xff]
      %v398 = vperm.slane %v392, 0
      %v399 = vmul.f32 %v398, %v395
      %v400 = vadd.f32 %v387, %v399
      %v401 = vperm.slane %v393, 0
      %v402 = vmul.f32 %v401, %v397
      %v403 = vsub.f32 %v400, %v402
      %v404 = vmul.f32 %v398, %v397
      %v405 = vadd.f32 %v391, %v404
      %v406 = vmul.f32 %v401, %v395
      %v407 = vadd.f32 %v405, %v406
      %v408 = vld [vmem:[%s302 + $0x5] sm:$0x1]
      %v409 = vld [vmem:[%s309 + $0x5] sm:$0x1]
      %s410 = scalar_lea.vmem %s313, 40
      %v411 = vld [vmem:[%s410] sm:$0xff]
      %s412 = scalar_lea.vmem %s317, 40
      %v413 = vld [vmem:[%s412] sm:$0xff]
      %v414 = vperm.slane %v408, 0
      %v415 = vmul.f32 %v414, %v411
      %v416 = vadd.f32 %v403, %v415
      %v417 = vperm.slane %v409, 0
      %v418 = vmul.f32 %v417, %v413
      %v419 = vsub.f32 %v416, %v418
      %v420 = vmul.f32 %v414, %v413
      %v421 = vadd.f32 %v407, %v420
      %v422 = vmul.f32 %v417, %v411
      %v423 = vadd.f32 %v421, %v422
      %v424 = vld [vmem:[%s302 + $0x6] sm:$0x1]
      %v425 = vld [vmem:[%s309 + $0x6] sm:$0x1]
      %s426 = scalar_lea.vmem %s313, 48
      %v427 = vld [vmem:[%s426] sm:$0xff]
      %s428 = scalar_lea.vmem %s317, 48
      %v429 = vld [vmem:[%s428] sm:$0xff]
      %v430 = vperm.slane %v424, 0
      %v431 = vmul.f32 %v430, %v427
      %v432 = vadd.f32 %v419, %v431
      %v433 = vperm.slane %v425, 0
      %v434 = vmul.f32 %v433, %v429
      %v435 = vsub.f32 %v432, %v434
      %v436 = vmul.f32 %v430, %v429
      %v437 = vadd.f32 %v423, %v436
      %v438 = vmul.f32 %v433, %v427
      %v439 = vadd.f32 %v437, %v438
      %v440 = vld [vmem:[%s302 + $0x7] sm:$0x1]
      %v441 = vld [vmem:[%s309 + $0x7] sm:$0x1]
      %s442 = scalar_lea.vmem %s313, 56
      %v443 = vld [vmem:[%s442] sm:$0xff]
      %s444 = scalar_lea.vmem %s317, 56
      %v445 = vld [vmem:[%s444] sm:$0xff]
      %v446 = vperm.slane %v440, 0
      %v447 = vmul.f32 %v446, %v443
      %v448 = vadd.f32 %v435, %v447
      %v449 = vperm.slane %v441, 0
      %v450 = vmul.f32 %v449, %v445
      %v451 = vsub.f32 %v448, %v450
      %v452 = vmul.f32 %v446, %v445
      %v453 = vadd.f32 %v439, %v452
      %v454 = vmul.f32 %v449, %v443
      %v455 = vadd.f32 %v453, %v454
      %456 = vst [vmem:[%s324] sm:$0xff] %v451
      %457 = vst [vmem:[%s331] sm:$0xff] %v455
      %p458 = scmp.lt.s32.totalorder %s22, 1
      %s459 = scalar_select %p458, %s22, 1
      %p460 = scmp.lt.s32.totalorder %s21, 0
      %s461 = scalar_select %p460, %s21, 0
      %s462 = sadd.s32 %s461, %s459
      %s463 = smul.addr %s462, 8
      %s464 = scalar_lea.vmem %s4, %s463
      %p465 = scmp.lt.s32.totalorder %s22, 1
      %s466 = scalar_select %p465, %s22, 1
      %p467 = scmp.lt.s32.totalorder %s21, 0
      %s468 = scalar_select %p467, %s21, 0
      %s469 = sadd.s32 %s468, %s466
      %s470 = smul.addr %s469, 8
      %s471 = scalar_lea.vmem %s5, %s470
      // Predicated region
      $region37: #{_lambda_.2} parent=35 // pred_check
        %p472 = pneg %p157
      $region38: #{_lambda_.2} parent=35 // pred_check_branch
        %474 = sbr.rel (%p472) target = $region40
      $region39: #{_lambda_.2} parent=35 // pred_region
        _
      $region40: #{_lambda_.2} parent=35 // pred_fallthru
        _
      // Predicated region
      $region41: #{_lambda_.2} parent=35 // pred_check
        %p475 = pneg %p185
      $region42: #{_lambda_.2} parent=35 // pred_check_branch
        %477 = sbr.rel (%p475) target = $region44
      $region43: #{_lambda_.2} parent=35 // pred_region
        _
      $region44: #{_lambda_.2} parent=35 // pred_fallthru
        _
    $region36: #{_lambda_.2} parent=5 // pred_fallthru
      _
    %p478 = scmp.le.s32.totalorder 2, %s12
    // Predicated region
    $region45: #{_lambda_.2} parent=5 // pred_check
      %p479 = pneg %p478
    $region46: #{_lambda_.2} parent=5 // pred_check_branch
      %481 = sbr.rel (%p479) target = $region48
    $region47: #{_lambda_.2} parent=5 // pred_region
      %s482 = ssub.s32 %s12, 2
      // Predicated region
      $region49: #{_lambda_.2} parent=47 // pred_check
        %p483 = pneg %p163
      $region50: #{_lambda_.2} parent=47 // pred_check_branch
        %485 = sbr.rel (%p483) target = $region52
      $region51: #{_lambda_.2} parent=47 // pred_region
        %p486 = scmp.lt.s32.totalorder %s24, 1
        %s487 = scalar_select %p486, %s24, 1
        %p488 = scmp.lt.s32.totalorder %s23, 0
        %s489 = scalar_select %p488, %s23, 0
        %s490 = sadd.s32 %s489, %s487
        %s491 = smul.addr %s490, 8
        %s492 = scalar_lea.vmem %s4, %s491
      $region52: #{_lambda_.2} parent=47 // pred_fallthru
        _
      // Predicated region
      $region53: #{_lambda_.2} parent=47 // pred_check
        %p493 = pneg %p191
      $region54: #{_lambda_.2} parent=47 // pred_check_branch
        %495 = sbr.rel (%p493) target = $region56
      $region55: #{_lambda_.2} parent=47 // pred_region
        %p496 = scmp.lt.s32.totalorder %s24, 1
        %s497 = scalar_select %p496, %s24, 1
        %p498 = scmp.lt.s32.totalorder %s23, 0
        %s499 = scalar_select %p498, %s23, 0
        %s500 = sadd.s32 %s499, %s497
        %s501 = smul.addr %s500, 8
        %s502 = scalar_lea.vmem %s5, %s501
      $region56: #{_lambda_.2} parent=47 // pred_fallthru
        _
    $region48: #{_lambda_.2} parent=5 // pred_fallthru
      _
  $region6: #{_lambda_.2} parent=0 // loop_footer
    %s16 = sadd.s32 1, %s12
  $region7: #{_lambda_.2} parent=0 // loop_footer_branch
    %11 = sbr.rel target = $region3
  $region8: #{_lambda_.2} parent=0 // loop_exit
    _

// kernel: reverse.0
$region0: #{reverse.0}
  %s0 = inlined_call_operand.vmem [shape: f32[2,8,2,16,7], index: 0, kind: input, shape index: {}]
  %s1 = inlined_call_operand.vmem [shape: f32[2,8,2,16,7], index: 1, kind: output, shape index: {}]
  $region1: #{reverse.0} parent=0
    #allocation0 [shape = 'u8[262144]{0}', space=vmem, size = 0x40000, scoped, tag = 'operand span for operand 0']
    #allocation1 [shape = 'u8[131072]{0}', space=vmem, size = 0x20000, scoped, tag = 'operand span for operand 1']
    %s2 = scalar_lea.vmem [#allocation0], 8
    // Predicated region
    $region2: #{reverse.0} parent=1 // pred_check
      _
    $region3: #{reverse.0} parent=1 // pred_check_branch
      %4 = sbr.rel (0) target = $region5
    $region4: #{reverse.0} parent=1 // pred_region
      // Predicated region
      $region6: #{reverse.0} parent=4 // pred_check
        _
      $region7: #{reverse.0} parent=4 // pred_check_branch
        %6 = sbr.rel (0) target = $region9
      $region8: #{reverse.0} parent=4 // pred_region
        // Predicated region
        $region21: #{reverse.0} parent=8 // pred_check
          _
        $region22: #{reverse.0} parent=8 // pred_check_branch
          %84 = sbr.rel (0) target = $region24
        $region23: #{reverse.0} parent=8 // pred_region
          loop: start=0, step=1, limit=1
          $region25: #{reverse.0} parent=23 // loop_pre_header
            _
          $region26: #{reverse.0} parent=23 // loop_header
            %s86 = sphi 0, %s90
            %p87 = scmp.ge.s32.totalorder %s86, 1
            %s91 = sphi %s0, %s0
            %s92 = sphi %s2, %s2
          $region27: #{reverse.0} parent=23 // loop_header_branch
            %89 = sbr.rel (%p87) target = $region31
          $region28: #{reverse.0} parent=23 // loop_body
            %v93 = vld [vmem:[%s91] sm:$0xff]
            %94 = vst [vmem:[%s92] sm:$0xff] %v93
            %v95 = vld [vmem:[%s91 + $0x8] sm:$0xff]
            %96 = vst [vmem:[%s92 + $0x10] sm:$0xff] %v95
            %v97 = vld [vmem:[%s91 + $0x10] sm:$0xff]
            %98 = vst [vmem:[%s92 + $0x20] sm:$0xff] %v97
            %v99 = vld [vmem:[%s91 + $0x18] sm:$0xff]
            %100 = vst [vmem:[%s92 + $0x30] sm:$0xff] %v99
            %v101 = vld [vmem:[%s91 + $0x20] sm:$0xff]
            %102 = vst [vmem:[%s92 + $0x40] sm:$0xff] %v101
            %v103 = vld [vmem:[%s91 + $0x28] sm:$0xff]
            %104 = vst [vmem:[%s92 + $0x50] sm:$0xff] %v103
            %v105 = vld [vmem:[%s91 + $0x30] sm:$0xff]
            %106 = vst [vmem:[%s92 + $0x60] sm:$0xff] %v105
            %v107 = vld [vmem:[%s91 + $0x38] sm:$0xff]
            %108 = vst [vmem:[%s92 + $0x70] sm:$0xff] %v107
            %v109 = vld [vmem:[%s91 + $0x40] sm:$0xff]
            %110 = vst [vmem:[%s92 + $0x80] sm:$0xff] %v109
            %v111 = vld [vmem:[%s91 + $0x48] sm:$0xff]
            %112 = vst [vmem:[%s92 + $0x90] sm:$0xff] %v111
            %v113 = vld [vmem:[%s91 + $0x50] sm:$0xff]
            %114 = vst [vmem:[%s92 + $0xa0] sm:$0xff] %v113
            %v115 = vld [vmem:[%s91 + $0x58] sm:$0xff]
            %116 = vst [vmem:[%s92 + $0xb0] sm:$0xff] %v115
            %v117 = vld [vmem:[%s91 + $0x60] sm:$0xff]
            %118 = vst [vmem:[%s92 + $0xc0] sm:$0xff] %v117
            %v119 = vld [vmem:[%s91 + $0x68] sm:$0xff]
            %120 = vst [vmem:[%s92 + $0xd0] sm:$0xff] %v119
            %v121 = vld [vmem:[%s91 + $0x70] sm:$0xff]
            %122 = vst [vmem:[%s92 + $0xe0] sm:$0xff] %v121
            %v123 = vld [vmem:[%s91 + $0x78] sm:$0xff]
            %124 = vst [vmem:[%s92 + $0xf0] sm:$0xff] %v123
            %v125 = vld [vmem:[%s91 + $0x80] sm:$0xff]
            %126 = vst [vmem:[%s92 + $0x100] sm:$0xff] %v125
            %v127 = vld [vmem:[%s91 + $0x88] sm:$0xff]
            %128 = vst [vmem:[%s92 + $0x110] sm:$0xff] %v127
            %v129 = vld [vmem:[%s91 + $0x90] sm:$0xff]
            %130 = vst [vmem:[%s92 + $0x120] sm:$0xff] %v129
            %v131 = vld [vmem:[%s91 + $0x98] sm:$0xff]
            %132 = vst [vmem:[%s92 + $0x130] sm:$0xff] %v131
            %v133 = vld [vmem:[%s91 + $0xa0] sm:$0xff]
            %134 = vst [vmem:[%s92 + $0x140] sm:$0xff] %v133
            %v135 = vld [vmem:[%s91 + $0xa8] sm:$0xff]
            %136 = vst [vmem:[%s92 + $0x150] sm:$0xff] %v135
            %v137 = vld [vmem:[%s91 + $0xb0] sm:$0xff]
            %138 = vst [vmem:[%s92 + $0x160] sm:$0xff] %v137
            %v139 = vld [vmem:[%s91 + $0xb8] sm:$0xff]
            %140 = vst [vmem:[%s92 + $0x170] sm:$0xff] %v139
            %v141 = vld [vmem:[%s91 + $0xc0] sm:$0xff]
            %142 = vst [vmem:[%s92 + $0x180] sm:$0xff] %v141
            %v143 = vld [vmem:[%s91 + $0xc8] sm:$0xff]
            %144 = vst [vmem:[%s92 + $0x190] sm:$0xff] %v143
            %v145 = vld [vmem:[%s91 + $0xd0] sm:$0xff]
            %146 = vst [vmem:[%s92 + $0x1a0] sm:$0xff] %v145
            %v147 = vld [vmem:[%s91 + $0xd8] sm:$0xff]
            %148 = vst [vmem:[%s92 + $0x1b0] sm:$0xff] %v147
            %v149 = vld [vmem:[%s91 + $0xe0] sm:$0xff]
            %150 = vst [vmem:[%s92 + $0x1c0] sm:$0xff] %v149
            %v151 = vld [vmem:[%s91 + $0xe8] sm:$0xff]
            %152 = vst [vmem:[%s92 + $0x1d0] sm:$0xff] %v151
            %v153 = vld [vmem:[%s91 + $0xf0] sm:$0xff]
            %154 = vst [vmem:[%s92 + $0x1e0] sm:$0xff] %v153
            %v155 = vld [vmem:[%s91 + $0xf8] sm:$0xff]
            %156 = vst [vmem:[%s92 + $0x1f0] sm:$0xff] %v155
          $region29: #{reverse.0} parent=23 // loop_footer
            %s90 = sadd.s32 1, %s86
          $region30: #{reverse.0} parent=23 // loop_footer_branch
            %85 = sbr.rel target = $region26
          $region31: #{reverse.0} parent=23 // loop_exit
            _
        $region24: #{reverse.0} parent=8 // pred_fallthru
          _
        // Predicated region
        $region32: #{reverse.0} parent=8 // pred_check
          _
        $region33: #{reverse.0} parent=8 // pred_check_branch
          %158 = sbr.rel target = $region35
        $region34: #{reverse.0} parent=8 // pred_region
          _
        $region35: #{reverse.0} parent=8 // pred_fallthru
          _
      $region9: #{reverse.0} parent=4 // pred_fallthru
        _
      // Predicated region
      $region10: #{reverse.0} parent=4 // pred_check
        _
      $region11: #{reverse.0} parent=4 // pred_check_branch
        %8 = sbr.rel target = $region13
      $region12: #{reverse.0} parent=4 // pred_region
        %s10 = ssub.s32 256, 1
        loop: start=0, step=1, limit=1
        $region14: #{reverse.0} parent=12 // loop_pre_header
          _
        $region15: #{reverse.0} parent=12 // loop_header
          %s12 = sphi 0, %s16
          %p13 = scmp.ge.s32.totalorder %s12, 1
          %s17 = sphi %s0, %s0
          %s18 = sphi %s2, %s2
        $region16: #{reverse.0} parent=12 // loop_header_branch
          %15 = sbr.rel (%p13) target = $region20
        $region17: #{reverse.0} parent=12 // loop_body
          %v19 = vld [vmem:[%s17] sm:%s10]
          %20 = vst [vmem:[%s18] sm:%s10] %v19
          %v21 = vld [vmem:[%s17 + $0x8] sm:%s10]
          %22 = vst [vmem:[%s18 + $0x10] sm:%s10] %v21
          %v23 = vld [vmem:[%s17 + $0x10] sm:%s10]
          %24 = vst [vmem:[%s18 + $0x20] sm:%s10] %v23
          %v25 = vld [vmem:[%s17 + $0x18] sm:%s10]
          %26 = vst [vmem:[%s18 + $0x30] sm:%s10] %v25
          %v27 = vld [vmem:[%s17 + $0x20] sm:%s10]
          %28 = vst [vmem:[%s18 + $0x40] sm:%s10] %v27
          %v29 = vld [vmem:[%s17 + $0x28] sm:%s10]
          %30 = vst [vmem:[%s18 + $0x50] sm:%s10] %v29
          %v31 = vld [vmem:[%s17 + $0x30] sm:%s10]
          %32 = vst [vmem:[%s18 + $0x60] sm:%s10] %v31
          %v33 = vld [vmem:[%s17 + $0x38] sm:%s10]
          %34 = vst [vmem:[%s18 + $0x70] sm:%s10] %v33
          %v35 = vld [vmem:[%s17 + $0x40] sm:%s10]
          %36 = vst [vmem:[%s18 + $0x80] sm:%s10] %v35
          %v37 = vld [vmem:[%s17 + $0x48] sm:%s10]
          %38 = vst [vmem:[%s18 + $0x90] sm:%s10] %v37
          %v39 = vld [vmem:[%s17 + $0x50] sm:%s10]
          %40 = vst [vmem:[%s18 + $0xa0] sm:%s10] %v39
          %v41 = vld [vmem:[%s17 + $0x58] sm:%s10]
          %42 = vst [vmem:[%s18 + $0xb0] sm:%s10] %v41
          %v43 = vld [vmem:[%s17 + $0x60] sm:%s10]
          %44 = vst [vmem:[%s18 + $0xc0] sm:%s10] %v43
          %v45 = vld [vmem:[%s17 + $0x68] sm:%s10]
          %46 = vst [vmem:[%s18 + $0xd0] sm:%s10] %v45
          %v47 = vld [vmem:[%s17 + $0x70] sm:%s10]
          %48 = vst [vmem:[%s18 + $0xe0] sm:%s10] %v47
          %v49 = vld [vmem:[%s17 + $0x78] sm:%s10]
          %50 = vst [vmem:[%s18 + $0xf0] sm:%s10] %v49
          %v51 = vld [vmem:[%s17 + $0x80] sm:%s10]
          %52 = vst [vmem:[%s18 + $0x100] sm:%s10] %v51
          %v53 = vld [vmem:[%s17 + $0x88] sm:%s10]
          %54 = vst [vmem:[%s18 + $0x110] sm:%s10] %v53
          %v55 = vld [vmem:[%s17 + $0x90] sm:%s10]
          %56 = vst [vmem:[%s18 + $0x120] sm:%s10] %v55
          %v57 = vld [vmem:[%s17 + $0x98] sm:%s10]
          %58 = vst [vmem:[%s18 + $0x130] sm:%s10] %v57
          %v59 = vld [vmem:[%s17 + $0xa0] sm:%s10]
          %60 = vst [vmem:[%s18 + $0x140] sm:%s10] %v59
          %v61 = vld [vmem:[%s17 + $0xa8] sm:%s10]
          %62 = vst [vmem:[%s18 + $0x150] sm:%s10] %v61
          %v63 = vld [vmem:[%s17 + $0xb0] sm:%s10]
          %64 = vst [vmem:[%s18 + $0x160] sm:%s10] %v63
          %v65 = vld [vmem:[%s17 + $0xb8] sm:%s10]
          %66 = vst [vmem:[%s18 + $0x170] sm:%s10] %v65
          %v67 = vld [vmem:[%s17 + $0xc0] sm:%s10]
          %68 = vst [vmem:[%s18 + $0x180] sm:%s10] %v67
          %v69 = vld [vmem:[%s17 + $0xc8] sm:%s10]
          %70 = vst [vmem:[%s18 + $0x190] sm:%s10] %v69
          %v71 = vld [vmem:[%s17 + $0xd0] sm:%s10]
          %72 = vst [vmem:[%s18 + $0x1a0] sm:%s10] %v71
          %v73 = vld [vmem:[%s17 + $0xd8] sm:%s10]
          %74 = vst [vmem:[%s18 + $0x1b0] sm:%s10] %v73
          %v75 = vld [vmem:[%s17 + $0xe0] sm:%s10]
          %76 = vst [vmem:[%s18 + $0x1c0] sm:%s10] %v75
          %v77 = vld [vmem:[%s17 + $0xe8] sm:%s10]
          %78 = vst [vmem:[%s18 + $0x1d0] sm:%s10] %v77
          %v79 = vld [vmem:[%s17 + $0xf0] sm:%s10]
          %80 = vst [vmem:[%s18 + $0x1e0] sm:%s10] %v79
          %v81 = vld [vmem:[%s17 + $0xf8] sm:%s10]
          %82 = vst [vmem:[%s18 + $0x1f0] sm:%s10] %v81
        $region18: #{reverse.0} parent=12 // loop_footer
          %s16 = sadd.s32 1, %s12
        $region19: #{reverse.0} parent=12 // loop_footer_branch
          %11 = sbr.rel target = $region15
        $region20: #{reverse.0} parent=12 // loop_exit
          _
      $region13: #{reverse.0} parent=4 // pred_fallthru
        _
    $region5: #{reverse.0} parent=1 // pred_fallthru
      _
    %159 = vnop
    %s160 = scalar_lea.vmem [#allocation0], 7
    %v161 = vld [vmem:[%s160] ss:$-1 sm:$0xff]
    %v162 = vrot.slane %v161, 1
    %163 = vst [vmem:[#allocation1] sm:$0xff] %v162
    %s164 = scalar_lea.vmem [#allocation0], 8
    %s165 = scalar_lea.vmem %s164, 7 [#allocation0]
    %v166 = vld [vmem:[%s165] ss:$-1 sm:$0xff]
    %v167 = vrot.slane %v166, 1
    %v168 = vlaneseq
    %v169 = vshrl.u32 %v168, 7
    %vm170 = vcmp.lt.s32.totalorder %v169, 7
    %171 = vst.msk [vmem:[#allocation1] sm:$0xff] %vm170, %v167
    %s172 = scalar_lea.vmem [#allocation1], 8
    %s173 = scalar_lea.vmem [#allocation0], 16
    %s174 = scalar_lea.vmem %s173, 7 [#allocation0]
    %v175 = vld [vmem:[%s174] ss:$-1 sm:$0xff]
    %v176 = vrot.slane %v175, 1
    %177 = vst [vmem:[%s172] sm:$0xff] %v176
    %s178 = scalar_lea.vmem %s173, 8 [#allocation0]
    %s179 = scalar_lea.vmem %s178, 7 [#allocation0]
    %v180 = vld [vmem:[%s179] ss:$-1 sm:$0xff]
    %v181 = vrot.slane %v180, 1
    %v182 = vlaneseq
    %v183 = vshrl.u32 %v182, 7
    %vm184 = vcmp.lt.s32.totalorder %v183, 7
    %185 = vst.msk [vmem:[%s172] sm:$0xff] %vm184, %v181
    %s186 = scalar_lea.vmem [#allocation1], 16
    %s187 = scalar_lea.vmem [#allocation0], 32
    %s188 = scalar_lea.vmem %s187, 7 [#allocation0]
    %v189 = vld [vmem:[%s188] ss:$-1 sm:$0xff]
    %v190 = vrot.slane %v189, 1
    %191 = vst [vmem:[%s186] sm:$0xff] %v190
    %s192 = scalar_lea.vmem %s187, 8 [#allocation0]
    %s193 = scalar_lea.vmem %s192, 7 [#allocation0]
    %v194 = vld [vmem:[%s193] ss:$-1 sm:$0xff]
    %v195 = vrot.slane %v194, 1
    %v196 = vlaneseq
    %v197 = vshrl.u32 %v196, 7
    %vm198 = vcmp.lt.s32.totalorder %v197, 7
    %199 = vst.msk [vmem:[%s186] sm:$0xff] %vm198, %v195
    %s200 = scalar_lea.vmem [#allocation1], 24
    %s201 = scalar_lea.vmem [#allocation0], 48
    %s202 = scalar_lea.vmem %s201, 7 [#allocation0]
    %v203 = vld [vmem:[%s202] ss:$-1 sm:$0xff]
    %v204 = vrot.slane %v203, 1
    %205 = vst [vmem:[%s200] sm:$0xff] %v204
    %s206 = scalar_lea.vmem %s201, 8 [#allocation0]
    %s207 = scalar_lea.vmem %s206, 7 [#allocation0]
    %v208 = vld [vmem:[%s207] ss:$-1 sm:$0xff]
    %v209 = vrot.slane %v208, 1
    %v210 = vlaneseq
    %v211 = vshrl.u32 %v210, 7
    %vm212 = vcmp.lt.s32.totalorder %v211, 7
    %213 = vst.msk [vmem:[%s200] sm:$0xff] %vm212, %v209
    %s214 = scalar_lea.vmem [#allocation1], 32
    %s215 = scalar_lea.vmem [#allocation0], 64
    %s216 = scalar_lea.vmem %s215, 7 [#allocation0]
    %v217 = vld [vmem:[%s216] ss:$-1 sm:$0xff]
    %v218 = vrot.slane %v217, 1
    %219 = vst [vmem:[%s214] sm:$0xff] %v218
    %s220 = scalar_lea.vmem %s215, 8 [#allocation0]
    %s221 = scalar_lea.vmem %s220, 7 [#allocation0]
    %v222 = vld [vmem:[%s221] ss:$-1 sm:$0xff]
    %v223 = vrot.slane %v222, 1
    %v224 = vlaneseq
    %v225 = vshrl.u32 %v224, 7
    %vm226 = vcmp.lt.s32.totalorder %v225, 7
    %227 = vst.msk [vmem:[%s214] sm:$0xff] %vm226, %v223
    %s228 = scalar_lea.vmem [#allocation1], 40
    %s229 = scalar_lea.vmem [#allocation0], 80
    %s230 = scalar_lea.vmem %s229, 7 [#allocation0]
    %v231 = vld [vmem:[%s230] ss:$-1 sm:$0xff]
    %v232 = vrot.slane %v231, 1
    %233 = vst [vmem:[%s228] sm:$0xff] %v232
    %s234 = scalar_lea.vmem %s229, 8 [#allocation0]
    %s235 = scalar_lea.vmem %s234, 7 [#allocation0]
    %v236 = vld [vmem:[%s235] ss:$-1 sm:$0xff]
    %v237 = vrot.slane %v236, 1
    %v238 = vlaneseq
    %v239 = vshrl.u32 %v238, 7
    %vm240 = vcmp.lt.s32.totalorder %v239, 7
    %241 = vst.msk [vmem:[%s228] sm:$0xff] %vm240, %v237
    %s242 = scalar_lea.vmem [#allocation1], 48
    %s243 = scalar_lea.vmem [#allocation0], 96
    %s244 = scalar_lea.vmem %s243, 7 [#allocation0]
    %v245 = vld [vmem:[%s244] ss:$-1 sm:$0xff]
    %v246 = vrot.slane %v245, 1
    %247 = vst [vmem:[%s242] sm:$0xff] %v246
    %s248 = scalar_lea.vmem %s243, 8 [#allocation0]
    %s249 = scalar_lea.vmem %s248, 7 [#allocation0]
    %v250 = vld [vmem:[%s249] ss:$-1 sm:$0xff]
    %v251 = vrot.slane %v250, 1
    %v252 = vlaneseq
    %v253 = vshrl.u32 %v252, 7
    %vm254 = vcmp.lt.s32.totalorder %v253, 7
    %255 = vst.msk [vmem:[%s242] sm:$0xff] %vm254, %v251
    %s256 = scalar_lea.vmem [#allocation1], 56
    %s257 = scalar_lea.vmem [#allocation0], 112
    %s258 = scalar_lea.vmem %s257, 7 [#allocation0]
    %v259 = vld [vmem:[%s258] ss:$-1 sm:$0xff]
    %v260 = vrot.slane %v259, 1
    %261 = vst [vmem:[%s256] sm:$0xff] %v260
    %s262 = scalar_lea.vmem %s257, 8 [#allocation0]
    %s263 = scalar_lea.vmem %s262, 7 [#allocation0]
    %v264 = vld [vmem:[%s263] ss:$-1 sm:$0xff]
    %v265 = vrot.slane %v264, 1
    %v266 = vlaneseq
    %v267 = vshrl.u32 %v266, 7
    %vm268 = vcmp.lt.s32.totalorder %v267, 7
    %269 = vst.msk [vmem:[%s256] sm:$0xff] %vm268, %v265
    %s270 = scalar_lea.vmem [#allocation1], 64
    %s271 = scalar_lea.vmem [#allocation0], 128
    %s272 = scalar_lea.vmem %s271, 7 [#allocation0]
    %v273 = vld [vmem:[%s272] ss:$-1 sm:$0xff]
    %v274 = vrot.slane %v273, 1
    %275 = vst [vmem:[%s270] sm:$0xff] %v274
    %s276 = scalar_lea.vmem %s271, 8 [#allocation0]
    %s277 = scalar_lea.vmem %s276, 7 [#allocation0]
    %v278 = vld [vmem:[%s277] ss:$-1 sm:$0xff]
    %v279 = vrot.slane %v278, 1
    %v280 = vlaneseq
    %v281 = vshrl.u32 %v280, 7
    %vm282 = vcmp.lt.s32.totalorder %v281, 7
    %283 = vst.msk [vmem:[%s270] sm:$0xff] %vm282, %v279
    %s284 = scalar_lea.vmem [#allocation1], 72
    %s285 = scalar_lea.vmem [#allocation0], 144
    %s286 = scalar_lea.vmem %s285, 7 [#allocation0]
    %v287 = vld [vmem:[%s286] ss:$-1 sm:$0xff]
    %v288 = vrot.slane %v287, 1
    %289 = vst [vmem:[%s284] sm:$0xff] %v288
    %s290 = scalar_lea.vmem %s285, 8 [#allocation0]
    %s291 = scalar_lea.vmem %s290, 7 [#allocation0]
    %v292 = vld [vmem:[%s291] ss:$-1 sm:$0xff]
    %v293 = vrot.slane %v292, 1
    %v294 = vlaneseq
    %v295 = vshrl.u32 %v294, 7
    %vm296 = vcmp.lt.s32.totalorder %v295, 7
    %297 = vst.msk [vmem:[%s284] sm:$0xff] %vm296, %v293
    %s298 = scalar_lea.vmem [#allocation1], 80
    %s299 = scalar_lea.vmem [#allocation0], 160
    %s300 = scalar_lea.vmem %s299, 7 [#allocation0]
    %v301 = vld [vmem:[%s300] ss:$-1 sm:$0xff]
    %v302 = vrot.slane %v301, 1
    %303 = vst [vmem:[%s298] sm:$0xff] %v302
    %s304 = scalar_lea.vmem %s299, 8 [#allocation0]
    %s305 = scalar_lea.vmem %s304, 7 [#allocation0]
    %v306 = vld [vmem:[%s305] ss:$-1 sm:$0xff]
    %v307 = vrot.slane %v306, 1
    %v308 = vlaneseq
    %v309 = vshrl.u32 %v308, 7
    %vm310 = vcmp.lt.s32.totalorder %v309, 7
    %311 = vst.msk [vmem:[%s298] sm:$0xff] %vm310, %v307
    %s312 = scalar_lea.vmem [#allocation1], 88
    %s313 = scalar_lea.vmem [#allocation0], 176
    %s314 = scalar_lea.vmem %s313, 7 [#allocation0]
    %v315 = vld [vmem:[%s314] ss:$-1 sm:$0xff]
    %v316 = vrot.slane %v315, 1
    %317 = vst [vmem:[%s312] sm:$0xff] %v316
    %s318 = scalar_lea.vmem %s313, 8 [#allocation0]
    %s319 = scalar_lea.vmem %s318, 7 [#allocation0]
    %v320 = vld [vmem:[%s319] ss:$-1 sm:$0xff]
    %v321 = vrot.slane %v320, 1
    %v322 = vlaneseq
    %v323 = vshrl.u32 %v322, 7
    %vm324 = vcmp.lt.s32.totalorder %v323, 7
    %325 = vst.msk [vmem:[%s312] sm:$0xff] %vm324, %v321
    %s326 = scalar_lea.vmem [#allocation1], 96
    %s327 = scalar_lea.vmem [#allocation0], 192
    %s328 = scalar_lea.vmem %s327, 7 [#allocation0]
    %v329 = vld [vmem:[%s328] ss:$-1 sm:$0xff]
    %v330 = vrot.slane %v329, 1
    %331 = vst [vmem:[%s326] sm:$0xff] %v330
    %s332 = scalar_lea.vmem %s327, 8 [#allocation0]
    %s333 = scalar_lea.vmem %s332, 7 [#allocation0]
    %v334 = vld [vmem:[%s333] ss:$-1 sm:$0xff]
    %v335 = vrot.slane %v334, 1
    %v336 = vlaneseq
    %v337 = vshrl.u32 %v336, 7
    %vm338 = vcmp.lt.s32.totalorder %v337, 7
    %339 = vst.msk [vmem:[%s326] sm:$0xff] %vm338, %v335
    %s340 = scalar_lea.vmem [#allocation1], 104
    %s341 = scalar_lea.vmem [#allocation0], 208
    %s342 = scalar_lea.vmem %s341, 7 [#allocation0]
    %v343 = vld [vmem:[%s342] ss:$-1 sm:$0xff]
    %v344 = vrot.slane %v343, 1
    %345 = vst [vmem:[%s340] sm:$0xff] %v344
    %s346 = scalar_lea.vmem %s341, 8 [#allocation0]
    %s347 = scalar_lea.vmem %s346, 7 [#allocation0]
    %v348 = vld [vmem:[%s347] ss:$-1 sm:$0xff]
    %v349 = vrot.slane %v348, 1
    %v350 = vlaneseq
    %v351 = vshrl.u32 %v350, 7
    %vm352 = vcmp.lt.s32.totalorder %v351, 7
    %353 = vst.msk [vmem:[%s340] sm:$0xff] %vm352, %v349
    %s354 = scalar_lea.vmem [#allocation1], 112
    %s355 = scalar_lea.vmem [#allocation0], 224
    %s356 = scalar_lea.vmem %s355, 7 [#allocation0]
    %v357 = vld [vmem:[%s356] ss:$-1 sm:$0xff]
    %v358 = vrot.slane %v357, 1
    %359 = vst [vmem:[%s354] sm:$0xff] %v358
    %s360 = scalar_lea.vmem %s355, 8 [#allocation0]
    %s361 = scalar_lea.vmem %s360, 7 [#allocation0]
    %v362 = vld [vmem:[%s361] ss:$-1 sm:$0xff]
    %v363 = vrot.slane %v362, 1
    %v364 = vlaneseq
    %v365 = vshrl.u32 %v364, 7
    %vm366 = vcmp.lt.s32.totalorder %v365, 7
    %367 = vst.msk [vmem:[%s354] sm:$0xff] %vm366, %v363
    %s368 = scalar_lea.vmem [#allocation1], 120
    %s369 = scalar_lea.vmem [#allocation0], 240
    %s370 = scalar_lea.vmem %s369, 7 [#allocation0]
    %v371 = vld [vmem:[%s370] ss:$-1 sm:$0xff]
    %v372 = vrot.slane %v371, 1
    %373 = vst [vmem:[%s368] sm:$0xff] %v372
    %s374 = scalar_lea.vmem %s369, 8 [#allocation0]
    %s375 = scalar_lea.vmem %s374, 7 [#allocation0]
    %v376 = vld [vmem:[%s375] ss:$-1 sm:$0xff]
    %v377 = vrot.slane %v376, 1
    %v378 = vlaneseq
    %v379 = vshrl.u32 %v378, 7
    %vm380 = vcmp.lt.s32.totalorder %v379, 7
    %381 = vst.msk [vmem:[%s368] sm:$0xff] %vm380, %v377
    %s382 = scalar_lea.vmem [#allocation1], 128
    %s383 = scalar_lea.vmem [#allocation0], 256
    %s384 = scalar_lea.vmem %s383, 7 [#allocation0]
    %v385 = vld [vmem:[%s384] ss:$-1 sm:$0xff]
    %v386 = vrot.slane %v385, 1
    %387 = vst [vmem:[%s382] sm:$0xff] %v386
    %s388 = scalar_lea.vmem %s383, 8 [#allocation0]
    %s389 = scalar_lea.vmem %s388, 7 [#allocation0]
    %v390 = vld [vmem:[%s389] ss:$-1 sm:$0xff]
    %v391 = vrot.slane %v390, 1
    %v392 = vlaneseq
    %v393 = vshrl.u32 %v392, 7
    %vm394 = vcmp.lt.s32.totalorder %v393, 7
    %395 = vst.msk [vmem:[%s382] sm:$0xff] %vm394, %v391
    %s396 = scalar_lea.vmem [#allocation1], 136
    %s397 = scalar_lea.vmem [#allocation0], 272
    %s398 = scalar_lea.vmem %s397, 7 [#allocation0]
    %v399 = vld [vmem:[%s398] ss:$-1 sm:$0xff]
    %v400 = vrot.slane %v399, 1
    %401 = vst [vmem:[%s396] sm:$0xff] %v400
    %s402 = scalar_lea.vmem %s397, 8 [#allocation0]
    %s403 = scalar_lea.vmem %s402, 7 [#allocation0]
    %v404 = vld [vmem:[%s403] ss:$-1 sm:$0xff]
    %v405 = vrot.slane %v404, 1
    %v406 = vlaneseq
    %v407 = vshrl.u32 %v406, 7
    %vm408 = vcmp.lt.s32.totalorder %v407, 7
    %409 = vst.msk [vmem:[%s396] sm:$0xff] %vm408, %v405
    %s410 = scalar_lea.vmem [#allocation1], 144
    %s411 = scalar_lea.vmem [#allocation0], 288
    %s412 = scalar_lea.vmem %s411, 7 [#allocation0]
    %v413 = vld [vmem:[%s412] ss:$-1 sm:$0xff]
    %v414 = vrot.slane %v413, 1
    %415 = vst [vmem:[%s410] sm:$0xff] %v414
    %s416 = scalar_lea.vmem %s411, 8 [#allocation0]
    %s417 = scalar_lea.vmem %s416, 7 [#allocation0]
    %v418 = vld [vmem:[%s417] ss:$-1 sm:$0xff]
    %v419 = vrot.slane %v418, 1
    %v420 = vlaneseq
    %v421 = vshrl.u32 %v420, 7
    %vm422 = vcmp.lt.s32.totalorder %v421, 7
    %423 = vst.msk [vmem:[%s410] sm:$0xff] %vm422, %v419
    %s424 = scalar_lea.vmem [#allocation1], 152
    %s425 = scalar_lea.vmem [#allocation0], 304
    %s426 = scalar_lea.vmem %s425, 7 [#allocation0]
    %v427 = vld [vmem:[%s426] ss:$-1 sm:$0xff]
    %v428 = vrot.slane %v427, 1
    %429 = vst [vmem:[%s424] sm:$0xff] %v428
    %s430 = scalar_lea.vmem %s425, 8 [#allocation0]
    %s431 = scalar_lea.vmem %s430, 7 [#allocation0]
    %v432 = vld [vmem:[%s431] ss:$-1 sm:$0xff]
    %v433 = vrot.slane %v432, 1
    %v434 = vlaneseq
    %v435 = vshrl.u32 %v434, 7
    %vm436 = vcmp.lt.s32.totalorder %v435, 7
    %437 = vst.msk [vmem:[%s424] sm:$0xff] %vm436, %v433
    %s438 = scalar_lea.vmem [#allocation1], 160
    %s439 = scalar_lea.vmem [#allocation0], 320
    %s440 = scalar_lea.vmem %s439, 7 [#allocation0]
    %v441 = vld [vmem:[%s440] ss:$-1 sm:$0xff]
    %v442 = vrot.slane %v441, 1
    %443 = vst [vmem:[%s438] sm:$0xff] %v442
    %s444 = scalar_lea.vmem %s439, 8 [#allocation0]
    %s445 = scalar_lea.vmem %s444, 7 [#allocation0]
    %v446 = vld [vmem:[%s445] ss:$-1 sm:$0xff]
    %v447 = vrot.slane %v446, 1
    %v448 = vlaneseq
    %v449 = vshrl.u32 %v448, 7
    %vm450 = vcmp.lt.s32.totalorder %v449, 7
    %451 = vst.msk [vmem:[%s438] sm:$0xff] %vm450, %v447
    %s452 = scalar_lea.vmem [#allocation1], 168
    %s453 = scalar_lea.vmem [#allocation0], 336
    %s454 = scalar_lea.vmem %s453, 7 [#allocation0]
    %v455 = vld [vmem:[%s454] ss:$-1 sm:$0xff]
    %v456 = vrot.slane %v455, 1
    %457 = vst [vmem:[%s452] sm:$0xff] %v456
    %s458 = scalar_lea.vmem %s453, 8 [#allocation0]
    %s459 = scalar_lea.vmem %s458, 7 [#allocation0]
    %v460 = vld [vmem:[%s459] ss:$-1 sm:$0xff]
    %v461 = vrot.slane %v460, 1
    %v462 = vlaneseq
    %v463 = vshrl.u32 %v462, 7
    %vm464 = vcmp.lt.s32.totalorder %v463, 7
    %465 = vst.msk [vmem:[%s452] sm:$0xff] %vm464, %v461
    %s466 = scalar_lea.vmem [#allocation1], 176
    %s467 = scalar_lea.vmem [#allocation0], 352
    %s468 = scalar_lea.vmem %s467, 7 [#allocation0]
    %v469 = vld [vmem:[%s468] ss:$-1 sm:$0xff]
    %v470 = vrot.slane %v469, 1
    %471 = vst [vmem:[%s466] sm:$0xff] %v470
    %s472 = scalar_lea.vmem %s467, 8 [#allocation0]
    %s473 = scalar_lea.vmem %s472, 7 [#allocation0]
    %v474 = vld [vmem:[%s473] ss:$-1 sm:$0xff]
    %v475 = vrot.slane %v474, 1
    %v476 = vlaneseq
    %v477 = vshrl.u32 %v476, 7
    %vm478 = vcmp.lt.s32.totalorder %v477, 7
    %479 = vst.msk [vmem:[%s466] sm:$0xff] %vm478, %v475
    %s480 = scalar_lea.vmem [#allocation1], 184
    %s481 = scalar_lea.vmem [#allocation0], 368
    %s482 = scalar_lea.vmem %s481, 7 [#allocation0]
    %v483 = vld [vmem:[%s482] ss:$-1 sm:$0xff]
    %v484 = vrot.slane %v483, 1
    %485 = vst [vmem:[%s480] sm:$0xff] %v484
    %s486 = scalar_lea.vmem %s481, 8 [#allocation0]
    %s487 = scalar_lea.vmem %s486, 7 [#allocation0]
    %v488 = vld [vmem:[%s487] ss:$-1 sm:$0xff]
    %v489 = vrot.slane %v488, 1
    %v490 = vlaneseq
    %v491 = vshrl.u32 %v490, 7
    %vm492 = vcmp.lt.s32.totalorder %v491, 7
    %493 = vst.msk [vmem:[%s480] sm:$0xff] %vm492, %v489
    %s494 = scalar_lea.vmem [#allocation1], 192
    %s495 = scalar_lea.vmem [#allocation0], 384
    %s496 = scalar_lea.vmem %s495, 7 [#allocation0]
    %v497 = vld [vmem:[%s496] ss:$-1 sm:$0xff]
    %v498 = vrot.slane %v497, 1
    %499 = vst [vmem:[%s494] sm:$0xff] %v498
    %s500 = scalar_lea.vmem %s495, 8 [#allocation0]
    %s501 = scalar_lea.vmem %s500, 7 [#allocation0]
    %v502 = vld [vmem:[%s501] ss:$-1 sm:$0xff]
    %v503 = vrot.slane %v502, 1
    %v504 = vlaneseq
    %v505 = vshrl.u32 %v504, 7
    %vm506 = vcmp.lt.s32.totalorder %v505, 7
    %507 = vst.msk [vmem:[%s494] sm:$0xff] %vm506, %v503
    %s508 = scalar_lea.vmem [#allocation1], 200
    %s509 = scalar_lea.vmem [#allocation0], 400
    %s510 = scalar_lea.vmem %s509, 7 [#allocation0]
    %v511 = vld [vmem:[%s510] ss:$-1 sm:$0xff]
    %v512 = vrot.slane %v511, 1
    %513 = vst [vmem:[%s508] sm:$0xff] %v512
    %s514 = scalar_lea.vmem %s509, 8 [#allocation0]
    %s515 = scalar_lea.vmem %s514, 7 [#allocation0]
    %v516 = vld [vmem:[%s515] ss:$-1 sm:$0xff]
    %v517 = vrot.slane %v516, 1
    %v518 = vlaneseq
    %v519 = vshrl.u32 %v518, 7
    %vm520 = vcmp.lt.s32.totalorder %v519, 7
    %521 = vst.msk [vmem:[%s508] sm:$0xff] %vm520, %v517
    %s522 = scalar_lea.vmem [#allocation1], 208
    %s523 = scalar_lea.vmem [#allocation0], 416
    %s524 = scalar_lea.vmem %s523, 7 [#allocation0]
    %v525 = vld [vmem:[%s524] ss:$-1 sm:$0xff]
    %v526 = vrot.slane %v525, 1
    %527 = vst [vmem:[%s522] sm:$0xff] %v526
    %s528 = scalar_lea.vmem %s523, 8 [#allocation0]
    %s529 = scalar_lea.vmem %s528, 7 [#allocation0]
    %v530 = vld [vmem:[%s529] ss:$-1 sm:$0xff]
    %v531 = vrot.slane %v530, 1
    %v532 = vlaneseq
    %v533 = vshrl.u32 %v532, 7
    %vm534 = vcmp.lt.s32.totalorder %v533, 7
    %535 = vst.msk [vmem:[%s522] sm:$0xff] %vm534, %v531
    %s536 = scalar_lea.vmem [#allocation1], 216
    %s537 = scalar_lea.vmem [#allocation0], 432
    %s538 = scalar_lea.vmem %s537, 7 [#allocation0]
    %v539 = vld [vmem:[%s538] ss:$-1 sm:$0xff]
    %v540 = vrot.slane %v539, 1
    %541 = vst [vmem:[%s536] sm:$0xff] %v540
    %s542 = scalar_lea.vmem %s537, 8 [#allocation0]
    %s543 = scalar_lea.vmem %s542, 7 [#allocation0]
    %v544 = vld [vmem:[%s543] ss:$-1 sm:$0xff]
    %v545 = vrot.slane %v544, 1
    %v546 = vlaneseq
    %v547 = vshrl.u32 %v546, 7
    %vm548 = vcmp.lt.s32.totalorder %v547, 7
    %549 = vst.msk [vmem:[%s536] sm:$0xff] %vm548, %v545
    %s550 = scalar_lea.vmem [#allocation1], 224
    %s551 = scalar_lea.vmem [#allocation0], 448
    %s552 = scalar_lea.vmem %s551, 7 [#allocation0]
    %v553 = vld [vmem:[%s552] ss:$-1 sm:$0xff]
    %v554 = vrot.slane %v553, 1
    %555 = vst [vmem:[%s550] sm:$0xff] %v554
    %s556 = scalar_lea.vmem %s551, 8 [#allocation0]
    %s557 = scalar_lea.vmem %s556, 7 [#allocation0]
    %v558 = vld [vmem:[%s557] ss:$-1 sm:$0xff]
    %v559 = vrot.slane %v558, 1
    %v560 = vlaneseq
    %v561 = vshrl.u32 %v560, 7
    %vm562 = vcmp.lt.s32.totalorder %v561, 7
    %563 = vst.msk [vmem:[%s550] sm:$0xff] %vm562, %v559
    %s564 = scalar_lea.vmem [#allocation1], 232
    %s565 = scalar_lea.vmem [#allocation0], 464
    %s566 = scalar_lea.vmem %s565, 7 [#allocation0]
    %v567 = vld [vmem:[%s566] ss:$-1 sm:$0xff]
    %v568 = vrot.slane %v567, 1
    %569 = vst [vmem:[%s564] sm:$0xff] %v568
    %s570 = scalar_lea.vmem %s565, 8 [#allocation0]
    %s571 = scalar_lea.vmem %s570, 7 [#allocation0]
    %v572 = vld [vmem:[%s571] ss:$-1 sm:$0xff]
    %v573 = vrot.slane %v572, 1
    %v574 = vlaneseq
    %v575 = vshrl.u32 %v574, 7
    %vm576 = vcmp.lt.s32.totalorder %v575, 7
    %577 = vst.msk [vmem:[%s564] sm:$0xff] %vm576, %v573
    %s578 = scalar_lea.vmem [#allocation1], 240
    %s579 = scalar_lea.vmem [#allocation0], 480
    %s580 = scalar_lea.vmem %s579, 7 [#allocation0]
    %v581 = vld [vmem:[%s580] ss:$-1 sm:$0xff]
    %v582 = vrot.slane %v581, 1
    %583 = vst [vmem:[%s578] sm:$0xff] %v582
    %s584 = scalar_lea.vmem %s579, 8 [#allocation0]
    %s585 = scalar_lea.vmem %s584, 7 [#allocation0]
    %v586 = vld [vmem:[%s585] ss:$-1 sm:$0xff]
    %v587 = vrot.slane %v586, 1
    %v588 = vlaneseq
    %v589 = vshrl.u32 %v588, 7
    %vm590 = vcmp.lt.s32.totalorder %v589, 7
    %591 = vst.msk [vmem:[%s578] sm:$0xff] %vm590, %v587
    %s592 = scalar_lea.vmem [#allocation1], 248
    %s593 = scalar_lea.vmem [#allocation0], 496
    %s594 = scalar_lea.vmem %s593, 7 [#allocation0]
    %v595 = vld [vmem:[%s594] ss:$-1 sm:$0xff]
    %v596 = vrot.slane %v595, 1
    %597 = vst [vmem:[%s592] sm:$0xff] %v596
    %s598 = scalar_lea.vmem %s593, 8 [#allocation0]
    %s599 = scalar_lea.vmem %s598, 7 [#allocation0]
    %v600 = vld [vmem:[%s599] ss:$-1 sm:$0xff]
    %v601 = vrot.slane %v600, 1
    %v602 = vlaneseq
    %v603 = vshrl.u32 %v602, 7
    %vm604 = vcmp.lt.s32.totalorder %v603, 7
    %605 = vst.msk [vmem:[%s592] sm:$0xff] %vm604, %v601
    // Predicated region
    $region36: #{reverse.0} parent=1 // pred_check
      _
    $region37: #{reverse.0} parent=1 // pred_check_branch
      %607 = sbr.rel (0) target = $region39
    $region38: #{reverse.0} parent=1 // pred_region
      // Predicated region
      $region40: #{reverse.0} parent=38 // pred_check
        _
      $region41: #{reverse.0} parent=38 // pred_check_branch
        %609 = sbr.rel (0) target = $region43
      $region42: #{reverse.0} parent=38 // pred_region
        // Predicated region
        $region55: #{reverse.0} parent=42 // pred_check
          _
        $region56: #{reverse.0} parent=42 // pred_check_branch
          %687 = sbr.rel (0) target = $region58
        $region57: #{reverse.0} parent=42 // pred_region
          loop: start=0, step=1, limit=1
          $region59: #{reverse.0} parent=57 // loop_pre_header
            _
          $region60: #{reverse.0} parent=57 // loop_header
            %s689 = sphi 0, %s693
            %p690 = scmp.ge.s32.totalorder %s689, 1
            %s694 = sphi [#allocation1], [#allocation1]
            %s695 = sphi %s1, %s1
          $region61: #{reverse.0} parent=57 // loop_header_branch
            %692 = sbr.rel (%p690) target = $region65
          $region62: #{reverse.0} parent=57 // loop_body
            %v696 = vld [vmem:[%s694] sm:$0xff]
            %697 = vst [vmem:[%s695] sm:$0xff] %v696
            %v698 = vld [vmem:[%s694 + $0x8] sm:$0xff]
            %699 = vst [vmem:[%s695 + $0x8] sm:$0xff] %v698
            %v700 = vld [vmem:[%s694 + $0x10] sm:$0xff]
            %701 = vst [vmem:[%s695 + $0x10] sm:$0xff] %v700
            %v702 = vld [vmem:[%s694 + $0x18] sm:$0xff]
            %703 = vst [vmem:[%s695 + $0x18] sm:$0xff] %v702
            %v704 = vld [vmem:[%s694 + $0x20] sm:$0xff]
            %705 = vst [vmem:[%s695 + $0x20] sm:$0xff] %v704
            %v706 = vld [vmem:[%s694 + $0x28] sm:$0xff]
            %707 = vst [vmem:[%s695 + $0x28] sm:$0xff] %v706
            %v708 = vld [vmem:[%s694 + $0x30] sm:$0xff]
            %709 = vst [vmem:[%s695 + $0x30] sm:$0xff] %v708
            %v710 = vld [vmem:[%s694 + $0x38] sm:$0xff]
            %711 = vst [vmem:[%s695 + $0x38] sm:$0xff] %v710
            %v712 = vld [vmem:[%s694 + $0x40] sm:$0xff]
            %713 = vst [vmem:[%s695 + $0x40] sm:$0xff] %v712
            %v714 = vld [vmem:[%s694 + $0x48] sm:$0xff]
            %715 = vst [vmem:[%s695 + $0x48] sm:$0xff] %v714
            %v716 = vld [vmem:[%s694 + $0x50] sm:$0xff]
            %717 = vst [vmem:[%s695 + $0x50] sm:$0xff] %v716
            %v718 = vld [vmem:[%s694 + $0x58] sm:$0xff]
            %719 = vst [vmem:[%s695 + $0x58] sm:$0xff] %v718
            %v720 = vld [vmem:[%s694 + $0x60] sm:$0xff]
            %721 = vst [vmem:[%s695 + $0x60] sm:$0xff] %v720
            %v722 = vld [vmem:[%s694 + $0x68] sm:$0xff]
            %723 = vst [vmem:[%s695 + $0x68] sm:$0xff] %v722
            %v724 = vld [vmem:[%s694 + $0x70] sm:$0xff]
            %725 = vst [vmem:[%s695 + $0x70] sm:$0xff] %v724
            %v726 = vld [vmem:[%s694 + $0x78] sm:$0xff]
            %727 = vst [vmem:[%s695 + $0x78] sm:$0xff] %v726
            %v728 = vld [vmem:[%s694 + $0x80] sm:$0xff]
            %729 = vst [vmem:[%s695 + $0x80] sm:$0xff] %v728
            %v730 = vld [vmem:[%s694 + $0x88] sm:$0xff]
            %731 = vst [vmem:[%s695 + $0x88] sm:$0xff] %v730
            %v732 = vld [vmem:[%s694 + $0x90] sm:$0xff]
            %733 = vst [vmem:[%s695 + $0x90] sm:$0xff] %v732
            %v734 = vld [vmem:[%s694 + $0x98] sm:$0xff]
            %735 = vst [vmem:[%s695 + $0x98] sm:$0xff] %v734
            %v736 = vld [vmem:[%s694 + $0xa0] sm:$0xff]
            %737 = vst [vmem:[%s695 + $0xa0] sm:$0xff] %v736
            %v738 = vld [vmem:[%s694 + $0xa8] sm:$0xff]
            %739 = vst [vmem:[%s695 + $0xa8] sm:$0xff] %v738
            %v740 = vld [vmem:[%s694 + $0xb0] sm:$0xff]
            %741 = vst [vmem:[%s695 + $0xb0] sm:$0xff] %v740
            %v742 = vld [vmem:[%s694 + $0xb8] sm:$0xff]
            %743 = vst [vmem:[%s695 + $0xb8] sm:$0xff] %v742
            %v744 = vld [vmem:[%s694 + $0xc0] sm:$0xff]
            %745 = vst [vmem:[%s695 + $0xc0] sm:$0xff] %v744
            %v746 = vld [vmem:[%s694 + $0xc8] sm:$0xff]
            %747 = vst [vmem:[%s695 + $0xc8] sm:$0xff] %v746
            %v748 = vld [vmem:[%s694 + $0xd0] sm:$0xff]
            %749 = vst [vmem:[%s695 + $0xd0] sm:$0xff] %v748
            %v750 = vld [vmem:[%s694 + $0xd8] sm:$0xff]
            %751 = vst [vmem:[%s695 + $0xd8] sm:$0xff] %v750
            %v752 = vld [vmem:[%s694 + $0xe0] sm:$0xff]
            %753 = vst [vmem:[%s695 + $0xe0] sm:$0xff] %v752
            %v754 = vld [vmem:[%s694 + $0xe8] sm:$0xff]
            %755 = vst [vmem:[%s695 + $0xe8] sm:$0xff] %v754
            %v756 = vld [vmem:[%s694 + $0xf0] sm:$0xff]
            %757 = vst [vmem:[%s695 + $0xf0] sm:$0xff] %v756
            %v758 = vld [vmem:[%s694 + $0xf8] sm:$0xff]
            %759 = vst [vmem:[%s695 + $0xf8] sm:$0xff] %v758
          $region63: #{reverse.0} parent=57 // loop_footer
            %s693 = sadd.s32 1, %s689
          $region64: #{reverse.0} parent=57 // loop_footer_branch
            %688 = sbr.rel target = $region60
          $region65: #{reverse.0} parent=57 // loop_exit
            _
        $region58: #{reverse.0} parent=42 // pred_fallthru
          _
        // Predicated region
        $region66: #{reverse.0} parent=42 // pred_check
          _
        $region67: #{reverse.0} parent=42 // pred_check_branch
          %761 = sbr.rel target = $region69
        $region68: #{reverse.0} parent=42 // pred_region
          _
        $region69: #{reverse.0} parent=42 // pred_fallthru
          _
      $region43: #{reverse.0} parent=38 // pred_fallthru
        _
      // Predicated region
      $region44: #{reverse.0} parent=38 // pred_check
        _
      $region45: #{reverse.0} parent=38 // pred_check_branch
        %611 = sbr.rel target = $region47
      $region46: #{reverse.0} parent=38 // pred_region
        %s613 = ssub.s32 256, 1
        loop: start=0, step=1, limit=1
        $region48: #{reverse.0} parent=46 // loop_pre_header
          _
        $region49: #{reverse.0} parent=46 // loop_header
          %s615 = sphi 0, %s619
          %p616 = scmp.ge.s32.totalorder %s615, 1
          %s620 = sphi [#allocation1], [#allocation1]
          %s621 = sphi %s1, %s1
        $region50: #{reverse.0} parent=46 // loop_header_branch
          %618 = sbr.rel (%p616) target = $region54
        $region51: #{reverse.0} parent=46 // loop_body
          %v622 = vld [vmem:[%s620] sm:%s613]
          %623 = vst [vmem:[%s621] sm:%s613] %v622
          %v624 = vld [vmem:[%s620 + $0x8] sm:%s613]
          %625 = vst [vmem:[%s621 + $0x8] sm:%s613] %v624
          %v626 = vld [vmem:[%s620 + $0x10] sm:%s613]
          %627 = vst [vmem:[%s621 + $0x10] sm:%s613] %v626
          %v628 = vld [vmem:[%s620 + $0x18] sm:%s613]
          %629 = vst [vmem:[%s621 + $0x18] sm:%s613] %v628
          %v630 = vld [vmem:[%s620 + $0x20] sm:%s613]
          %631 = vst [vmem:[%s621 + $0x20] sm:%s613] %v630
          %v632 = vld [vmem:[%s620 + $0x28] sm:%s613]
          %633 = vst [vmem:[%s621 + $0x28] sm:%s613] %v632
          %v634 = vld [vmem:[%s620 + $0x30] sm:%s613]
          %635 = vst [vmem:[%s621 + $0x30] sm:%s613] %v634
          %v636 = vld [vmem:[%s620 + $0x38] sm:%s613]
          %637 = vst [vmem:[%s621 + $0x38] sm:%s613] %v636
          %v638 = vld [vmem:[%s620 + $0x40] sm:%s613]
          %639 = vst [vmem:[%s621 + $0x40] sm:%s613] %v638
          %v640 = vld [vmem:[%s620 + $0x48] sm:%s613]
          %641 = vst [vmem:[%s621 + $0x48] sm:%s613] %v640
          %v642 = vld [vmem:[%s620 + $0x50] sm:%s613]
          %643 = vst [vmem:[%s621 + $0x50] sm:%s613] %v642
          %v644 = vld [vmem:[%s620 + $0x58] sm:%s613]
          %645 = vst [vmem:[%s621 + $0x58] sm:%s613] %v644
          %v646 = vld [vmem:[%s620 + $0x60] sm:%s613]
          %647 = vst [vmem:[%s621 + $0x60] sm:%s613] %v646
          %v648 = vld [vmem:[%s620 + $0x68] sm:%s613]
          %649 = vst [vmem:[%s621 + $0x68] sm:%s613] %v648
          %v650 = vld [vmem:[%s620 + $0x70] sm:%s613]
          %651 = vst [vmem:[%s621 + $0x70] sm:%s613] %v650
          %v652 = vld [vmem:[%s620 + $0x78] sm:%s613]
          %653 = vst [vmem:[%s621 + $0x78] sm:%s613] %v652
          %v654 = vld [vmem:[%s620 + $0x80] sm:%s613]
          %655 = vst [vmem:[%s621 + $0x80] sm:%s613] %v654
          %v656 = vld [vmem:[%s620 + $0x88] sm:%s613]
          %657 = vst [vmem:[%s621 + $0x88] sm:%s613] %v656
          %v658 = vld [vmem:[%s620 + $0x90] sm:%s613]
          %659 = vst [vmem:[%s621 + $0x90] sm:%s613] %v658
          %v660 = vld [vmem:[%s620 + $0x98] sm:%s613]
          %661 = vst [vmem:[%s621 + $0x98] sm:%s613] %v660
          %v662 = vld [vmem:[%s620 + $0xa0] sm:%s613]
          %663 = vst [vmem:[%s621 + $0xa0] sm:%s613] %v662
          %v664 = vld [vmem:[%s620 + $0xa8] sm:%s613]
          %665 = vst [vmem:[%s621 + $0xa8] sm:%s613] %v664
          %v666 = vld [vmem:[%s620 + $0xb0] sm:%s613]
          %667 = vst [vmem:[%s621 + $0xb0] sm:%s613] %v666
          %v668 = vld [vmem:[%s620 + $0xb8] sm:%s613]
          %669 = vst [vmem:[%s621 + $0xb8] sm:%s613] %v668
          %v670 = vld [vmem:[%s620 + $0xc0] sm:%s613]
          %671 = vst [vmem:[%s621 + $0xc0] sm:%s613] %v670
          %v672 = vld [vmem:[%s620 + $0xc8] sm:%s613]
          %673 = vst [vmem:[%s621 + $0xc8] sm:%s613] %v672
          %v674 = vld [vmem:[%s620 + $0xd0] sm:%s613]
          %675 = vst [vmem:[%s621 + $0xd0] sm:%s613] %v674
          %v676 = vld [vmem:[%s620 + $0xd8] sm:%s613]
          %677 = vst [vmem:[%s621 + $0xd8] sm:%s613] %v676
          %v678 = vld [vmem:[%s620 + $0xe0] sm:%s613]
          %679 = vst [vmem:[%s621 + $0xe0] sm:%s613] %v678
          %v680 = vld [vmem:[%s620 + $0xe8] sm:%s613]
          %681 = vst [vmem:[%s621 + $0xe8] sm:%s613] %v680
          %v682 = vld [vmem:[%s620 + $0xf0] sm:%s613]
          %683 = vst [vmem:[%s621 + $0xf0] sm:%s613] %v682
          %v684 = vld [vmem:[%s620 + $0xf8] sm:%s613]
          %685 = vst [vmem:[%s621 + $0xf8] sm:%s613] %v684
        $region52: #{reverse.0} parent=46 // loop_footer
          %s619 = sadd.s32 1, %s615
        $region53: #{reverse.0} parent=46 // loop_footer_branch
          %614 = sbr.rel target = $region49
        $region54: #{reverse.0} parent=46 // loop_exit
          _
      $region47: #{reverse.0} parent=38 // pred_fallthru
        _
    $region39: #{reverse.0} parent=1 // pred_fallthru
      _
    %762 = vnop

// kernel: _lambda_.3
$region0: #{_lambda_.3}
  #allocation0 [shape = 'u32[]', space=smem, size = 0x4, offset = 0x4, fixed_abs, tag = 'smem constant byte address 0x4 - core index']
  #allocation1 [shape = 'u32[72,128]{1,0:T(1,128)}', space=vmem, size = 0x9000, scoped, tag = 'internal scratch']
  %s0 = inlined_call_operand.vmem [shape: f32[2,8,512], index: 0, kind: input, shape index: {}]
  %s1 = inlined_call_operand.vmem [shape: f32[2,8,512], index: 1, kind: input, shape index: {}]
  %s2 = inlined_call_operand.vmem [shape: f32[2,2,512], index: 2, kind: input, shape index: {}]
  %s3 = inlined_call_operand.vmem [shape: bf16[8,8], index: 3, kind: input, shape index: {}]
  %s4 = inlined_call_operand.vmem [shape: f32[8,1], index: 4, kind: input, shape index: {}]
  %s5 = inlined_call_operand.vmem [shape: bf16[8,18], index: 5, kind: input, shape index: {}]
  %s6 = inlined_call_operand.vmem [shape: f32[8,1], index: 6, kind: input, shape index: {}]
  %s7 = inlined_call_operand.vmem [shape: f32[2,8,512], index: 7, kind: output, shape index: {}]
  %s8 = sld [smem:[#allocation0]]
  $region61: #{_lambda_.3} parent=0
    _
  %s10 = ssub.s32 1, %s8
  %s11 = scalar_select 0, %s10, %s8
  loop: start=0, step=1, limit=4
  $region2: #{_lambda_.3} parent=0 // loop_pre_header
    _
  $region3: #{_lambda_.3} parent=0 // loop_header
    %s13 = sphi 0, %s17
    %p14 = scmp.ge.s32.totalorder %s13, 4
    %s20 = sphi 0, %s32
    %s21 = sphi 0, %s28
    %s22 = sphi 0, %s20
    %s23 = sphi 0, %s21
    %s24 = sphi 0, %s22
    %s25 = sphi 0, %s23
    %s37 = sphi 0, %s39
    %s40 = sphi 0, %s37
    %s41 = sphi 0, %s40
    %s57 = sphi 0, %s41
    %s65 = sphi 0, %s67
    %s68 = sphi 0, %s65
    %s69 = sphi 0, %s68
    %s85 = sphi 0, %s69
    %s93 = sphi 0, %s95
    %s96 = sphi 0, %s93
    %s97 = sphi 0, %s96
    %s113 = sphi 0, %s97
    %s117 = sphi 0, %s117
    %s119 = sphi 0, %s117
    %s120 = sphi 0, %s119
    %s134 = sphi 0, %s120
    %s138 = sphi 0, %s138
    %s140 = sphi 0, %s138
    %s141 = sphi 0, %s140
    %s155 = sphi 0, %s141
    %s159 = sphi 0, %s159
    %s161 = sphi 0, %s159
    %s162 = sphi 0, %s161
    %s176 = sphi 0, %s162
    %s180 = sphi 0, %s180
    %s182 = sphi 0, %s180
    %s183 = sphi 0, %s182
    %s197 = sphi 0, %s183
    %s205 = sphi 0, %s207
    %s208 = sphi 0, %s205
    %s209 = sphi 0, %s208
    %s225 = sphi 0, %s209
  $region4: #{_lambda_.3} parent=0 // loop_header_branch
    %16 = sbr.rel (%p14) target = $region8
  $region5: #{_lambda_.3} parent=0 // loop_body
    %s18 = ssub.s32 %s13, 1
    %s19 = ssub.s32 %s13, 2
    %s26 = sadd.s32 1, %s21
    %p27 = scmp.ge.s32.totalorder %s26, 1
    %s28 = scalar_select %p27, 0, %s26
    %s29 = sadd.s32 1, %s20
    %s30 = scalar_select %p27, %s29, %s20
    %p31 = scmp.ge.s32.totalorder %s30, 2
    %s32 = scalar_select %p31, 0, %s30
    %s33 = ssub.s32 %s20, %s32
    %s34 = ssub.s32 %s21, %s28
    %s35 = sor.u32 %s33, %s34
    %p36 = scmp.eq.s32.totalorder %s35, 0
    %s38 = sadd.s32 %s37, 1
    %s39 = scalar_select %p36, %s37, %s38
    %p42 = pneg %p36
    %p43 = scmp.eq.s32.totalorder %s13, 1
    %p44 = por %p42, %p43
    %p45 = scmp.ne.s32.totalorder %s37, %s40
    %p46 = scmp.eq.s32.totalorder %s13, 0
    %p47 = por %p45, %p46
    %p48 = scmp.ne.s32.totalorder %s37, %s40
    %p49 = scmp.eq.s32.totalorder %s18, 1
    %p50 = por %p48, %p49
    %p51 = scmp.ne.s32.totalorder %s40, %s41
    %p52 = scmp.eq.s32.totalorder %s18, 0
    %p53 = por %p51, %p52
    %p54 = scmp.ne.s32.totalorder %s40, %s41
    %p55 = scmp.eq.s32.totalorder %s19, 1
    %p56 = por %p54, %p55
    %p58 = scmp.ne.s32.totalorder %s41, %s57
    %p59 = scmp.eq.s32.totalorder %s19, 0
    %p60 = por %p58, %p59
    %s61 = ssub.s32 %s20, %s32
    %s62 = ssub.s32 %s21, %s28
    %s63 = sor.u32 %s61, %s62
    %p64 = scmp.eq.s32.totalorder %s63, 0
    %s66 = sadd.s32 %s65, 1
    %s67 = scalar_select %p64, %s65, %s66
    %p70 = pneg %p64
    %p71 = scmp.eq.s32.totalorder %s13, 1
    %p72 = por %p70, %p71
    %p73 = scmp.ne.s32.totalorder %s65, %s68
    %p74 = scmp.eq.s32.totalorder %s13, 0
    %p75 = por %p73, %p74
    %p76 = scmp.ne.s32.totalorder %s65, %s68
    %p77 = scmp.eq.s32.totalorder %s18, 1
    %p78 = por %p76, %p77
    %p79 = scmp.ne.s32.totalorder %s68, %s69
    %p80 = scmp.eq.s32.totalorder %s18, 0
    %p81 = por %p79, %p80
    %p82 = scmp.ne.s32.totalorder %s68, %s69
    %p83 = scmp.eq.s32.totalorder %s19, 1
    %p84 = por %p82, %p83
    %p86 = scmp.ne.s32.totalorder %s69, %s85
    %p87 = scmp.eq.s32.totalorder %s19, 0
    %p88 = por %p86, %p87
    %s89 = ssub.s32 %s20, %s32
    %s90 = ssub.s32 %s21, %s28
    %s91 = sor.u32 %s89, %s90
    %p92 = scmp.eq.s32.totalorder %s91, 0
    %s94 = sadd.s32 %s93, 1
    %s95 = scalar_select %p92, %s93, %s94
    %p98 = pneg %p92
    %p99 = scmp.eq.s32.totalorder %s13, 1
    %p100 = por %p98, %p99
    %p101 = scmp.ne.s32.totalorder %s93, %s96
    %p102 = scmp.eq.s32.totalorder %s13, 0
    %p103 = por %p101, %p102
    %p104 = scmp.ne.s32.totalorder %s93, %s96
    %p105 = scmp.eq.s32.totalorder %s18, 1
    %p106 = por %p104, %p105
    %p107 = scmp.ne.s32.totalorder %s96, %s97
    %p108 = scmp.eq.s32.totalorder %s18, 0
    %p109 = por %p107, %p108
    %p110 = scmp.ne.s32.totalorder %s96, %s97
    %p111 = scmp.eq.s32.totalorder %s19, 1
    %p112 = por %p110, %p111
    %p114 = scmp.ne.s32.totalorder %s97, %s113
    %p115 = scmp.eq.s32.totalorder %s19, 0
    %p116 = por %p114, %p115
    %s118 = sadd.s32 %s117, 1
    %p121 = scmp.eq.s32.totalorder %s13, 1
    %p122 = scmp.ne.s32.totalorder %s117, %s119
    %p123 = scmp.eq.s32.totalorder %s13, 0
    %p124 = por %p122, %p123
    %p125 = scmp.ne.s32.totalorder %s117, %s119
    %p126 = scmp.eq.s32.totalorder %s18, 1
    %p127 = por %p125, %p126
    %p128 = scmp.ne.s32.totalorder %s119, %s120
    %p129 = scmp.eq.s32.totalorder %s18, 0
    %p130 = por %p128, %p129
    %p131 = scmp.ne.s32.totalorder %s119, %s120
    %p132 = scmp.eq.s32.totalorder %s19, 1
    %p133 = por %p131, %p132
    %p135 = scmp.ne.s32.totalorder %s120, %s134
    %p136 = scmp.eq.s32.totalorder %s19, 0
    %p137 = por %p135, %p136
    %s139 = sadd.s32 %s138, 1
    %p142 = scmp.eq.s32.totalorder %s13, 1
    %p143 = scmp.ne.s32.totalorder %s138, %s140
    %p144 = scmp.eq.s32.totalorder %s13, 0
    %p145 = por %p143, %p144
    %p146 = scmp.ne.s32.totalorder %s138, %s140
    %p147 = scmp.eq.s32.totalorder %s18, 1
    %p148 = por %p146, %p147
    %p149 = scmp.ne.s32.totalorder %s140, %s141
    %p150 = scmp.eq.s32.totalorder %s18, 0
    %p151 = por %p149, %p150
    %p152 = scmp.ne.s32.totalorder %s140, %s141
    %p153 = scmp.eq.s32.totalorder %s19, 1
    %p154 = por %p152, %p153
    %p156 = scmp.ne.s32.totalorder %s141, %s155
    %p157 = scmp.eq.s32.totalorder %s19, 0
    %p158 = por %p156, %p157
    %s160 = sadd.s32 %s159, 1
    %p163 = scmp.eq.s32.totalorder %s13, 1
    %p164 = scmp.ne.s32.totalorder %s159, %s161
    %p165 = scmp.eq.s32.totalorder %s13, 0
    %p166 = por %p164, %p165
    %p167 = scmp.ne.s32.totalorder %s159, %s161
    %p168 = scmp.eq.s32.totalorder %s18, 1
    %p169 = por %p167, %p168
    %p170 = scmp.ne.s32.totalorder %s161, %s162
    %p171 = scmp.eq.s32.totalorder %s18, 0
    %p172 = por %p170, %p171
    %p173 = scmp.ne.s32.totalorder %s161, %s162
    %p174 = scmp.eq.s32.totalorder %s19, 1
    %p175 = por %p173, %p174
    %p177 = scmp.ne.s32.totalorder %s162, %s176
    %p178 = scmp.eq.s32.totalorder %s19, 0
    %p179 = por %p177, %p178
    %s181 = sadd.s32 %s180, 1
    %p184 = scmp.eq.s32.totalorder %s13, 1
    %p185 = scmp.ne.s32.totalorder %s180, %s182
    %p186 = scmp.eq.s32.totalorder %s13, 0
    %p187 = por %p185, %p186
    %p188 = scmp.ne.s32.totalorder %s180, %s182
    %p189 = scmp.eq.s32.totalorder %s18, 1
    %p190 = por %p188, %p189
    %p191 = scmp.ne.s32.totalorder %s182, %s183
    %p192 = scmp.eq.s32.totalorder %s18, 0
    %p193 = por %p191, %p192
    %p194 = scmp.ne.s32.totalorder %s182, %s183
    %p195 = scmp.eq.s32.totalorder %s19, 1
    %p196 = por %p194, %p195
    %p198 = scmp.ne.s32.totalorder %s183, %s197
    %p199 = scmp.eq.s32.totalorder %s19, 0
    %p200 = por %p198, %p199
    %s201 = ssub.s32 %s20, %s32
    %s202 = ssub.s32 %s21, %s28
    %s203 = sor.u32 %s201, %s202
    %p204 = scmp.eq.s32.totalorder %s203, 0
    %s206 = sadd.s32 %s205, 1
    %s207 = scalar_select %p204, %s205, %s206
    %p210 = pneg %p204
    %p211 = scmp.eq.s32.totalorder %s13, 1
    %p212 = por %p210, %p211
    %p213 = scmp.ne.s32.totalorder %s205, %s208
    %p214 = scmp.eq.s32.totalorder %s13, 0
    %p215 = por %p213, %p214
    %p216 = scmp.ne.s32.totalorder %s205, %s208
    %p217 = scmp.eq.s32.totalorder %s18, 1
    %p218 = por %p216, %p217
    %p219 = scmp.ne.s32.totalorder %s208, %s209
    %p220 = scmp.eq.s32.totalorder %s18, 0
    %p221 = por %p219, %p220
    %p222 = scmp.ne.s32.totalorder %s208, %s209
    %p223 = scmp.eq.s32.totalorder %s19, 1
    %p224 = por %p222, %p223
    %p226 = scmp.ne.s32.totalorder %s209, %s225
    %p227 = scmp.eq.s32.totalorder %s19, 0
    %p228 = por %p226, %p227
    %p229 = scmp.le.s32.totalorder 1, %s13
    %p230 = scmp.lt.s32.totalorder %s13, 3
    %p231 = pnand %p229, %p230
    %p232 = pneg %p231
    // Predicated region
    $region9: #{_lambda_.3} parent=5 // pred_check
      _
    $region10: #{_lambda_.3} parent=5 // pred_check_branch
      %234 = sbr.rel (%p231) target = $region12
    $region11: #{_lambda_.3} parent=5 // pred_region
      %s235 = ssub.s32 %s13, 1
      // Predicated region
      $region13: #{_lambda_.3} parent=11 // pred_check
        %p236 = pneg %p130
      $region14: #{_lambda_.3} parent=11 // pred_check_branch
        %238 = sbr.rel (%p236) target = $region16
      $region15: #{_lambda_.3} parent=11 // pred_region
        _
      $region16: #{_lambda_.3} parent=11 // pred_fallthru
        _
      // Predicated region
      $region17: #{_lambda_.3} parent=11 // pred_check
        %p239 = pneg %p151
      $region18: #{_lambda_.3} parent=11 // pred_check_branch
        %241 = sbr.rel (%p239) target = $region20
      $region19: #{_lambda_.3} parent=11 // pred_region
        _
      $region20: #{_lambda_.3} parent=11 // pred_fallthru
        _
      // Predicated region
      $region21: #{_lambda_.3} parent=11 // pred_check
        %p242 = pneg %p172
      $region22: #{_lambda_.3} parent=11 // pred_check_branch
        %244 = sbr.rel (%p242) target = $region24
      $region23: #{_lambda_.3} parent=11 // pred_region
        _
      $region24: #{_lambda_.3} parent=11 // pred_fallthru
        _
      // Predicated region
      $region25: #{_lambda_.3} parent=11 // pred_check
        %p245 = pneg %p193
      $region26: #{_lambda_.3} parent=11 // pred_check_branch
        %247 = sbr.rel (%p245) target = $region28
      $region27: #{_lambda_.3} parent=11 // pred_region
        _
      $region28: #{_lambda_.3} parent=11 // pred_fallthru
        _
    $region12: #{_lambda_.3} parent=5 // pred_fallthru
      _
    %p248 = scmp.lt.s32.totalorder %s13, 2
    // Predicated region
    $region29: #{_lambda_.3} parent=5 // pred_check
      %p249 = pneg %p248
    $region30: #{_lambda_.3} parent=5 // pred_check_branch
      %251 = sbr.rel (%p249) target = $region32
    $region31: #{_lambda_.3} parent=5 // pred_region
      // Predicated region
      $region33: #{_lambda_.3} parent=31 // pred_check
        %p252 = pneg %p47
      $region34: #{_lambda_.3} parent=31 // pred_check_branch
        %254 = sbr.rel (%p252) target = $region36
      $region35: #{_lambda_.3} parent=31 // pred_region
        %s255 = smul.u32 4, %s21
        %p256 = scmp.lt.s32.totalorder %s20, 1
        %s257 = scalar_select %p256, %s20, 1
        %p258 = scmp.lt.s32.totalorder %s255, 3
        %s259 = scalar_select %p258, %s255, 3
        %s260 = smul.addr %s257, 4
        %s261 = sadd.s32 %s259, %s260
        %s262 = smul.addr %s261, 8
        %s263 = scalar_lea.vmem %s0, %s262
        %s264 = smul.u32 4, %s21
      $region36: #{_lambda_.3} parent=31 // pred_fallthru
        _
      // Predicated region
      $region37: #{_lambda_.3} parent=31 // pred_check
        %p265 = pneg %p75
      $region38: #{_lambda_.3} parent=31 // pred_check_branch
        %267 = sbr.rel (%p265) target = $region40
      $region39: #{_lambda_.3} parent=31 // pred_region
        %s268 = smul.u32 4, %s21
        %p269 = scmp.lt.s32.totalorder %s20, 1
        %s270 = scalar_select %p269, %s20, 1
        %p271 = scmp.lt.s32.totalorder %s268, 3
        %s272 = scalar_select %p271, %s268, 3
        %s273 = smul.addr %s270, 4
        %s274 = sadd.s32 %s272, %s273
        %s275 = smul.addr %s274, 8
        %s276 = scalar_lea.vmem %s1, %s275
        %s277 = smul.u32 4, %s21
      $region40: #{_lambda_.3} parent=31 // pred_fallthru
        _
      // Predicated region
      $region41: #{_lambda_.3} parent=31 // pred_check
        %p278 = pneg %p103
      $region42: #{_lambda_.3} parent=31 // pred_check_branch
        %280 = sbr.rel (%p278) target = $region44
      $region43: #{_lambda_.3} parent=31 // pred_region
        %s281 = smul.u32 4, %s21
        %p282 = scmp.lt.s32.totalorder %s20, 1
        %s283 = scalar_select %p282, %s20, 1
        %p284 = scmp.lt.s32.totalorder %s281, 3
        %s285 = scalar_select %p284, %s281, 3
        %s286 = smul.addr %s283, 4
        %s287 = sadd.s32 %s285, %s286
        %s288 = smul.addr %s287, 2
        %s289 = scalar_lea.vmem %s2, %s288
        %s290 = smul.u32 4, %s21
      $region44: #{_lambda_.3} parent=31 // pred_fallthru
        _
    $region32: #{_lambda_.3} parent=5 // pred_fallthru
      _
    %p291 = scmp.le.s32.totalorder 1, %s13
    %p292 = scmp.lt.s32.totalorder %s13, 3
    %p293 = pnand %p291, %p292
    %p294 = pneg %p293
    // Predicated region
    $region45: #{_lambda_.3} parent=5 // pred_check
      _
    $region46: #{_lambda_.3} parent=5 // pred_check_branch
      %296 = sbr.rel (%p293) target = $region48
    $region47: #{_lambda_.3} parent=5 // pred_region
      %s297 = ssub.s32 %s13, 1
      %s298 = smul.u32 4, %s23
      %p299 = scmp.lt.s32.totalorder %s22, 1
      %s300 = scalar_select %p299, %s22, 1
      %p301 = scmp.lt.s32.totalorder %s298, 3
      %s302 = scalar_select %p301, %s298, 3
      %s303 = smul.addr %s300, 4
      %s304 = sadd.s32 %s302, %s303
      %s305 = smul.addr %s304, 8
      %s306 = scalar_lea.vmem %s0, %s305
      %p307 = pneg %p53
      %p308 = pneg %p50
      %s309 = smul.u32 4, %s23
      %p310 = scmp.lt.s32.totalorder %s22, 1
      %s311 = scalar_select %p310, %s22, 1
      %p312 = scmp.lt.s32.totalorder %s309, 3
      %s313 = scalar_select %p312, %s309, 3
      %s314 = smul.addr %s311, 4
      %s315 = sadd.s32 %s313, %s314
      %s316 = smul.addr %s315, 8
      %s317 = scalar_lea.vmem %s1, %s316
      %p318 = pneg %p81
      %p319 = pneg %p78
      %s320 = smul.u32 4, %s23
      %p321 = scmp.lt.s32.totalorder %s22, 1
      %s322 = scalar_select %p321, %s22, 1
      %p323 = scmp.lt.s32.totalorder %s320, 3
      %s324 = scalar_select %p323, %s320, 3
      %s325 = smul.addr %s322, 4
      %s326 = sadd.s32 %s324, %s325
      %s327 = smul.addr %s326, 2
      %s328 = scalar_lea.vmem %s2, %s327
      %p329 = pneg %p109
      %p330 = pneg %p106
      %p331 = pneg %p130
      %p332 = pneg %p127
      %p333 = pneg %p151
      %p334 = pneg %p148
      %p335 = pneg %p172
      %p336 = pneg %p169
      %p337 = pneg %p193
      %p338 = pneg %p190
      %p339 = pneg %p221
      %p340 = pneg %p218
      %s341 = smul.u32 4, %s23
      %p342 = scmp.lt.s32.totalorder %s22, 1
      %s343 = scalar_select %p342, %s22, 1
      %p344 = scmp.lt.s32.totalorder %s341, 3
      %s345 = scalar_select %p344, %s341, 3
      %s346 = smul.addr %s343, 4
      %s347 = sadd.s32 %s345, %s346
      %s348 = smul.addr %s347, 8
      %s349 = scalar_lea.vmem %s7, %s348
      %s350 = smul.u32 4, %s23
      %p351 = scmp.lt.s32.totalorder %s22, 1
      %s352 = scalar_select %p351, %s22, 1
      %p353 = scmp.lt.s32.totalorder %s350, 3
      %s354 = scalar_select %p353, %s350, 3
      %s355 = smul.addr %s352, 4
      %s356 = sadd.s32 %s354, %s355
      %s357 = smul.addr %s356, 8
      %s358 = scalar_lea.vmem %s0, %s357
      %s359 = smul.u32 4, %s23
      %s360 = smul.u32 4, %s23
      %p361 = scmp.lt.s32.totalorder %s22, 1
      %s362 = scalar_select %p361, %s22, 1
      %p363 = scmp.lt.s32.totalorder %s360, 3
      %s364 = scalar_select %p363, %s360, 3
      %s365 = smul.addr %s362, 4
      %s366 = sadd.s32 %s364, %s365
      %s367 = smul.addr %s366, 8
      %s368 = scalar_lea.vmem %s1, %s367
      %s369 = smul.u32 4, %s23
      %s370 = smul.u32 4, %s23
      %p371 = scmp.lt.s32.totalorder %s22, 1
      %s372 = scalar_select %p371, %s22, 1
      %p373 = scmp.lt.s32.totalorder %s370, 3
      %s374 = scalar_select %p373, %s370, 3
      %s375 = smul.addr %s372, 4
      %s376 = sadd.s32 %s374, %s375
      %s377 = smul.addr %s376, 2
      %s378 = scalar_lea.vmem %s2, %s377
      %s379 = smul.u32 4, %s23
      %s380 = smul.u32 4, %s23
      %p381 = scmp.lt.s32.totalorder %s22, 1
      %s382 = scalar_select %p381, %s22, 1
      %p383 = scmp.lt.s32.totalorder %s380, 3
      %s384 = scalar_select %p383, %s380, 3
      %s385 = smul.addr %s382, 4
      %s386 = sadd.s32 %s384, %s385
      %s387 = smul.addr %s386, 8
      %s388 = scalar_lea.vmem %s7, %s387
      %s389 = smul.u32 4, %s23
      %v391 = vld [vmem:[%s358] sm:$0xff]
      %v392 = vld [vmem:[%s358 + $0x8] sm:$0xff]
      %v393 = vld [vmem:[%s358 + $0x10] sm:$0xff]
      %v394 = vld [vmem:[%s358 + $0x18] sm:$0xff]
      %v395 = vpack.c.bf16 %v391, %v391
      %v396 = vpack.c.bf16 %v392, %v392
      %v397 = vpack.c.bf16 %v393, %v393
      %v398 = vpack.c.bf16 %v394, %v394
      %v399 = vld [vmem:[%s3] sm:$0xf]
      %v400 = vld [vmem:[%s4] sm:$0xff]
      %402 = vset.pattern.permute.xlu0 0
      %403 = vperm.xlu0 %402, %v400
      %v404 = vpop.permute.xlu0 %403
      %vm406 = vcmask 64512
      %v408 = vsel %vm406, %v399, 0
      %vm410 = vcmask 1043456
      %v412 = vsel %vm410, %v395, 0
      %v415 = vsel %vm410, %v396, 0
      %v418 = vsel %vm410, %v397, 0
      %v421 = vsel %vm410, %v398, 0
      %423 = vmatpush.bf16.msra.mxu0 0
      %424 = vmatpush.bf16.msra.mxu0 0
      %425 = vmatpush.bf16.msra.mxu0 0
      %426 = vmatpush.bf16.msra.mxu0 0
      %427 = vmatpush.bf16.msra.mxu0 0
      %428 = vmatpush.bf16.msra.mxu0 0
      %429 = vmatpush.bf16.msra.mxu0 0
      %430 = vmatpush.bf16.msra.mxu0 %v412
      %431 = vmatmul.bf16.gmra.mxu0 %v408
      %v432 = vpop.f32.mrf.mxu0
      %v433 = vadd.f32 %v404, %v432
      %v434 = vpop.f32.mrf.mxu0
      %435 = vdwg.mxu0
      %436 = vmatpush.bf16.msra.mxu0 0
      %437 = vmatpush.bf16.msra.mxu0 0
      %438 = vmatpush.bf16.msra.mxu0 0
      %439 = vmatpush.bf16.msra.mxu0 0
      %440 = vmatpush.bf16.msra.mxu0 0
      %441 = vmatpush.bf16.msra.mxu0 0
      %442 = vmatpush.bf16.msra.mxu0 0
      %443 = vmatpush.bf16.msra.mxu0 %v415
      %444 = vmatmul.bf16.gmra.mxu0 %v408
      %v445 = vpop.f32.mrf.mxu0
      %v446 = vadd.f32 %v404, %v445
      %v447 = vpop.f32.mrf.mxu0
      %448 = vdwg.mxu0
      %449 = vmatpush.bf16.msra.mxu0 0
      %450 = vmatpush.bf16.msra.mxu0 0
      %451 = vmatpush.bf16.msra.mxu0 0
      %452 = vmatpush.bf16.msra.mxu0 0
      %453 = vmatpush.bf16.msra.mxu0 0
      %454 = vmatpush.bf16.msra.mxu0 0
      %455 = vmatpush.bf16.msra.mxu0 0
      %456 = vmatpush.bf16.msra.mxu0 %v418
      %457 = vmatmul.bf16.gmra.mxu0 %v408
      %v458 = vpop.f32.mrf.mxu0
      %v459 = vadd.f32 %v404, %v458
      %v460 = vpop.f32.mrf.mxu0
      %461 = vdwg.mxu0
      %462 = vmatpush.bf16.msra.mxu0 0
      %463 = vmatpush.bf16.msra.mxu0 0
      %464 = vmatpush.bf16.msra.mxu0 0
      %465 = vmatpush.bf16.msra.mxu0 0
      %466 = vmatpush.bf16.msra.mxu0 0
      %467 = vmatpush.bf16.msra.mxu0 0
      %468 = vmatpush.bf16.msra.mxu0 0
      %469 = vmatpush.bf16.msra.mxu0 %v421
      %470 = vmatmul.bf16.gmra.mxu0 %v408
      %v471 = vpop.f32.mrf.mxu0
      %v472 = vadd.f32 %v404, %v471
      %v473 = vpop.f32.mrf.mxu0
      %474 = vdwg.mxu0
      %v475 = vmul.f32 %v433, 0.5
      %v476 = vmul.f32 %v446, 0.5
      %v477 = vmul.f32 %v459, 0.5
      %v478 = vmul.f32 %v472, 0.5
      %v479 = vmul.f32 %v433, 0.70710677
      %v480 = vmul.f32 %v446, 0.70710677
      %v481 = vmul.f32 %v459, 0.70710677
      %v482 = vmul.f32 %v472, 0.70710677
      %v483 = vmax.f32 %v479, -4.0
      %v484 = vmax.f32 %v480, -4.0
      %v485 = vmax.f32 %v481, -4.0
      %v486 = vmax.f32 %v482, -4.0
      %v487 = vmin.f32 %v483, 4.0
      %v488 = vmin.f32 %v484, 4.0
      %v489 = vmin.f32 %v485, 4.0
      %v490 = vmin.f32 %v486, 4.0
      %v491 = vmul.f32 %v487, %v487
      %v492 = vmul.f32 %v488, %v488
      %v493 = vmul.f32 %v489, %v489
      %v494 = vmul.f32 %v490, %v490
      %v495 = vmul.f32 %v491, -2.7261424e-10
      %v496 = vmul.f32 %v492, -2.7261424e-10
      %v497 = vmul.f32 %v493, -2.7261424e-10
      %v498 = vmul.f32 %v494, -2.7261424e-10
      %v499 = vadd.f32 %v495, 2.7706815e-08
      %v500 = vadd.f32 %v496, 2.7706815e-08
      %v501 = vadd.f32 %v497, 2.7706815e-08
      %v502 = vadd.f32 %v498, 2.7706815e-08
      %v503 = vmul.f32 %v491, %v499
      %v504 = vmul.f32 %v492, %v500
      %v505 = vmul.f32 %v493, %v501
      %v506 = vmul.f32 %v494, %v502
      %v507 = vadd.f32 %v503, -2.101024e-06
      %v508 = vadd.f32 %v504, -2.101024e-06
      %v509 = vadd.f32 %v505, -2.101024e-06
      %v510 = vadd.f32 %v506, -2.101024e-06
      %v511 = vmul.f32 %v491, %v507
      %v512 = vmul.f32 %v492, %v508
      %v513 = vmul.f32 %v493, %v509
      %v514 = vmul.f32 %v494, %v510
      %v515 = vadd.f32 %v511, -5.6925062e-05
      %v516 = vadd.f32 %v512, -5.6925062e-05
      %v517 = vadd.f32 %v513, -5.6925062e-05
      %v518 = vadd.f32 %v514, -5.6925062e-05
      %v519 = vmul.f32 %v491, %v515
      %v520 = vmul.f32 %v492, %v516
      %v521 = vmul.f32 %v493, %v517
      %v522 = vmul.f32 %v494, %v518
      %v523 = vadd.f32 %v519, -0.00073499064
      %v524 = vadd.f32 %v520, -0.00073499064
      %v525 = vadd.f32 %v521, -0.00073499064
      %v526 = vadd.f32 %v522, -0.00073499064
      %v527 = vmul.f32 %v491, %v523
      %v528 = vmul.f32 %v492, %v524
      %v529 = vmul.f32 %v493, %v525
      %v530 = vmul.f32 %v494, %v526
      %v531 = vadd.f32 %v527, -0.0029546
      %v532 = vadd.f32 %v528, -0.0029546
      %v533 = vadd.f32 %v529, -0.0029546
      %v534 = vadd.f32 %v530, -0.0029546
      %v535 = vmul.f32 %v491, %v531
      %v536 = vmul.f32 %v492, %v532
      %v537 = vmul.f32 %v493, %v533
      %v538 = vmul.f32 %v494, %v534
      %v539 = vadd.f32 %v535, -0.016096033
      %v540 = vadd.f32 %v536, -0.016096033
      %v541 = vadd.f32 %v537, -0.016096033
      %v542 = vadd.f32 %v538, -0.016096033
      %v543 = vmul.f32 %v539, %v487
      %v544 = vmul.f32 %v540, %v488
      %v545 = vmul.f32 %v541, %v489
      %v546 = vmul.f32 %v542, %v490
      %v547 = vmul.f32 %v491, -1.45660715e-05
      %v548 = vmul.f32 %v492, -1.45660715e-05
      %v549 = vmul.f32 %v493, -1.45660715e-05
      %v550 = vmul.f32 %v494, -1.45660715e-05
      %v551 = vadd.f32 %v547, -0.00021337405
      %v552 = vadd.f32 %v548, -0.00021337405
      %v553 = vadd.f32 %v549, -0.00021337405
      %v554 = vadd.f32 %v550, -0.00021337405
      %v555 = vmul.f32 %v491, %v551
      %v556 = vmul.f32 %v492, %v552
      %v557 = vmul.f32 %v493, %v553
      %v558 = vmul.f32 %v494, %v554
      %v559 = vadd.f32 %v555, -0.001682827
      %v560 = vadd.f32 %v556, -0.001682827
      %v561 = vadd.f32 %v557, -0.001682827
      %v562 = vadd.f32 %v558, -0.001682827
      %v563 = vmul.f32 %v491, %v559
      %v564 = vmul.f32 %v492, %v560
      %v565 = vmul.f32 %v493, %v561
      %v566 = vmul.f32 %v494, %v562
      %v567 = vadd.f32 %v563, -0.0073733293
      %v568 = vadd.f32 %v564, -0.0073733293
      %v569 = vadd.f32 %v565, -0.0073733293
      %v570 = vadd.f32 %v566, -0.0073733293
      %v571 = vmul.f32 %v491, %v567
      %v572 = vmul.f32 %v492, %v568
      %v573 = vmul.f32 %v493, %v569
      %v574 = vmul.f32 %v494, %v570
      %v575 = vadd.f32 %v571, -0.014264739
      %v576 = vadd.f32 %v572, -0.014264739
      %v577 = vadd.f32 %v573, -0.014264739
      %v578 = vadd.f32 %v574, -0.014264739
      %v579 = vrcp.pop %v575
      %v580 = vrcp.pop %v576
      %v581 = vrcp.pop %v577
      %v582 = vrcp.pop %v578
      %v583 = vmul.f32 %v575, %v579
      %v584 = vmul.f32 %v576, %v580
      %v585 = vmul.f32 %v577, %v581
      %v586 = vmul.f32 %v578, %v582
      %v587 = vsub.f32 2.0, %v583
      %v588 = vsub.f32 2.0, %v584
      %v589 = vsub.f32 2.0, %v585
      %v590 = vsub.f32 2.0, %v586
      %v591 = vmul.f32 %v579, %v587
      %v592 = vmul.f32 %v580, %v588
      %v593 = vmul.f32 %v581, %v589
      %v594 = vmul.f32 %v582, %v590
      %v595 = vmul.f32 %v543, %v591
      %v596 = vmul.f32 %v544, %v592
      %v597 = vmul.f32 %v545, %v593
      %v598 = vmul.f32 %v546, %v594
      %v599 = vadd.f32 %v595, 1.0
      %v600 = vadd.f32 %v596, 1.0
      %v601 = vadd.f32 %v597, 1.0
      %v602 = vadd.f32 %v598, 1.0
      %v603 = vmul.f32 %v475, %v599
      %v604 = vmul.f32 %v476, %v600
      %v605 = vmul.f32 %v477, %v601
      %v606 = vmul.f32 %v478, %v602
      %v607 = vld [vmem:[%s368] sm:$0xff]
      %v608 = vld [vmem:[%s368 + $0x8] sm:$0xff]
      %v609 = vld [vmem:[%s368 + $0x10] sm:$0xff]
      %v610 = vld [vmem:[%s368 + $0x18] sm:$0xff]
      %v611 = vld [vmem:[%s378] sm:$0xff]
      %613 = vst [vmem:[#allocation1] ss:$4 sm:$0xff] %v611
      %v614 = vld.sshfl [vmem:[#allocation1] sm:$0xff pattern:$0x73625140]
      %v615 = vld.sshfl [vmem:[#allocation1 + $0x8] sm:$0xff pattern:$0x73625140]
      %v616 = vld.sshfl [vmem:[#allocation1 + $0x10] sm:$0xff pattern:$0x73625140]
      %v617 = vld.sshfl [vmem:[#allocation1 + $0x18] sm:$0xff pattern:$0x73625140]
      %v622 = vpack.c.bf16 %v607, %v603
      %v623 = vpack.c.bf16 %v608, %v604
      %v624 = vpack.c.bf16 %v609, %v605
      %v625 = vpack.c.bf16 %v610, %v606
      %v626 = vpack.c.bf16 %v614, %v614
      %v627 = vpack.c.bf16 %v615, %v615
      %v628 = vpack.c.bf16 %v616, %v616
      %v629 = vpack.c.bf16 %v617, %v617
      %v630 = vld [vmem:[%s5] sm:$0xf]
      %v631 = vld [vmem:[%s6] sm:$0xff]
      %633 = vset.pattern.permute.xlu0 0
      %634 = vperm.xlu0 %633, %v631
      %v635 = vpop.permute.xlu0 %634
      %vm637 = vcmask 146432
      %v639 = vsel %vm637, %v630, 0
      %vm641 = vcmask 1040384
      %v643 = vsel %vm641, %v626, 0
      %v646 = vsel %vm641, %v627, 0
      %v649 = vsel %vm641, %v628, 0
      %v652 = vsel %vm641, %v629, 0
      %654 = vmatpush.bf16.msra.mxu0 0
      %655 = vmatpush.bf16.msra.mxu0 0
      %656 = vmatpush.bf16.msra.mxu0 0
      %657 = vmatpush.bf16.msra.mxu0 0
      %658 = vmatpush.bf16.msra.mxu0 0
      %659 = vmatpush.bf16.msra.mxu0 0
      %660 = vmatpush.bf16.msra.mxu0 %v643
      %661 = vmatpush.bf16.msra.mxu0 %v622
      %662 = vmatmul.bf16.gmra.mxu0 %v639
      %v663 = vpop.f32.mrf.mxu0
      %v664 = vadd.f32 %v635, %v663
      %v665 = vpop.f32.mrf.mxu0
      %666 = vdwg.mxu0
      %667 = vmatpush.bf16.msra.mxu0 0
      %668 = vmatpush.bf16.msra.mxu0 0
      %669 = vmatpush.bf16.msra.mxu0 0
      %670 = vmatpush.bf16.msra.mxu0 0
      %671 = vmatpush.bf16.msra.mxu0 0
      %672 = vmatpush.bf16.msra.mxu0 0
      %673 = vmatpush.bf16.msra.mxu0 %v646
      %674 = vmatpush.bf16.msra.mxu0 %v623
      %675 = vmatmul.bf16.gmra.mxu0 %v639
      %v676 = vpop.f32.mrf.mxu0
      %v677 = vadd.f32 %v635, %v676
      %v678 = vpop.f32.mrf.mxu0
      %679 = vdwg.mxu0
      %680 = vmatpush.bf16.msra.mxu0 0
      %681 = vmatpush.bf16.msra.mxu0 0
      %682 = vmatpush.bf16.msra.mxu0 0
      %683 = vmatpush.bf16.msra.mxu0 0
      %684 = vmatpush.bf16.msra.mxu0 0
      %685 = vmatpush.bf16.msra.mxu0 0
      %686 = vmatpush.bf16.msra.mxu0 %v649
      %687 = vmatpush.bf16.msra.mxu0 %v624
      %688 = vmatmul.bf16.gmra.mxu0 %v639
      %v689 = vpop.f32.mrf.mxu0
      %v690 = vadd.f32 %v635, %v689
      %v691 = vpop.f32.mrf.mxu0
      %692 = vdwg.mxu0
      %693 = vmatpush.bf16.msra.mxu0 0
      %694 = vmatpush.bf16.msra.mxu0 0
      %695 = vmatpush.bf16.msra.mxu0 0
      %696 = vmatpush.bf16.msra.mxu0 0
      %697 = vmatpush.bf16.msra.mxu0 0
      %698 = vmatpush.bf16.msra.mxu0 0
      %699 = vmatpush.bf16.msra.mxu0 %v652
      %700 = vmatpush.bf16.msra.mxu0 %v625
      %701 = vmatmul.bf16.gmra.mxu0 %v639
      %v702 = vpop.f32.mrf.mxu0
      %v703 = vadd.f32 %v635, %v702
      %v704 = vpop.f32.mrf.mxu0
      %705 = vdwg.mxu0
      %v706 = vmul.f32 %v664, 0.5
      %v707 = vmul.f32 %v677, 0.5
      %v708 = vmul.f32 %v690, 0.5
      %v709 = vmul.f32 %v703, 0.5
      %v710 = vmul.f32 %v664, 0.70710677
      %v711 = vmul.f32 %v677, 0.70710677
      %v712 = vmul.f32 %v690, 0.70710677
      %v713 = vmul.f32 %v703, 0.70710677
      %v714 = vmax.f32 %v710, -4.0
      %v715 = vmax.f32 %v711, -4.0
      %v716 = vmax.f32 %v712, -4.0
      %v717 = vmax.f32 %v713, -4.0
      %v718 = vmin.f32 %v714, 4.0
      %v719 = vmin.f32 %v715, 4.0
      %v720 = vmin.f32 %v716, 4.0
      %v721 = vmin.f32 %v717, 4.0
      %v722 = vmul.f32 %v718, %v718
      %v723 = vmul.f32 %v719, %v719
      %v724 = vmul.f32 %v720, %v720
      %v725 = vmul.f32 %v721, %v721
      %v726 = vmul.f32 %v722, -2.7261424e-10
      %v727 = vmul.f32 %v723, -2.7261424e-10
      %v728 = vmul.f32 %v724, -2.7261424e-10
      %v729 = vmul.f32 %v725, -2.7261424e-10
      %v730 = vadd.f32 %v726, 2.7706815e-08
      %v731 = vadd.f32 %v727, 2.7706815e-08
      %v732 = vadd.f32 %v728, 2.7706815e-08
      %v733 = vadd.f32 %v729, 2.7706815e-08
      %v734 = vmul.f32 %v722, %v730
      %v735 = vmul.f32 %v723, %v731
      %v736 = vmul.f32 %v724, %v732
      %v737 = vmul.f32 %v725, %v733
      %v738 = vadd.f32 %v734, -2.101024e-06
      %v739 = vadd.f32 %v735, -2.101024e-06
      %v740 = vadd.f32 %v736, -2.101024e-06
      %v741 = vadd.f32 %v737, -2.101024e-06
      %v742 = vmul.f32 %v722, %v738
      %v743 = vmul.f32 %v723, %v739
      %v744 = vmul.f32 %v724, %v740
      %v745 = vmul.f32 %v725, %v741
      %v746 = vadd.f32 %v742, -5.6925062e-05
      %v747 = vadd.f32 %v743, -5.6925062e-05
      %v748 = vadd.f32 %v744, -5.6925062e-05
      %v749 = vadd.f32 %v745, -5.6925062e-05
      %v750 = vmul.f32 %v722, %v746
      %v751 = vmul.f32 %v723, %v747
      %v752 = vmul.f32 %v724, %v748
      %v753 = vmul.f32 %v725, %v749
      %v754 = vadd.f32 %v750, -0.00073499064
      %v755 = vadd.f32 %v751, -0.00073499064
      %v756 = vadd.f32 %v752, -0.00073499064
      %v757 = vadd.f32 %v753, -0.00073499064
      %v758 = vmul.f32 %v722, %v754
      %v759 = vmul.f32 %v723, %v755
      %v760 = vmul.f32 %v724, %v756
      %v761 = vmul.f32 %v725, %v757
      %v762 = vadd.f32 %v758, -0.0029546
      %v763 = vadd.f32 %v759, -0.0029546
      %v764 = vadd.f32 %v760, -0.0029546
      %v765 = vadd.f32 %v761, -0.0029546
      %v766 = vmul.f32 %v722, %v762
      %v767 = vmul.f32 %v723, %v763
      %v768 = vmul.f32 %v724, %v764
      %v769 = vmul.f32 %v725, %v765
      %v770 = vadd.f32 %v766, -0.016096033
      %v771 = vadd.f32 %v767, -0.016096033
      %v772 = vadd.f32 %v768, -0.016096033
      %v773 = vadd.f32 %v769, -0.016096033
      %v774 = vmul.f32 %v770, %v718
      %v775 = vmul.f32 %v771, %v719
      %v776 = vmul.f32 %v772, %v720
      %v777 = vmul.f32 %v773, %v721
      %v778 = vmul.f32 %v722, -1.45660715e-05
      %v779 = vmul.f32 %v723, -1.45660715e-05
      %v780 = vmul.f32 %v724, -1.45660715e-05
      %v781 = vmul.f32 %v725, -1.45660715e-05
      %v782 = vadd.f32 %v778, -0.00021337405
      %v783 = vadd.f32 %v779, -0.00021337405
      %v784 = vadd.f32 %v780, -0.00021337405
      %v785 = vadd.f32 %v781, -0.00021337405
      %v786 = vmul.f32 %v722, %v782
      %v787 = vmul.f32 %v723, %v783
      %v788 = vmul.f32 %v724, %v784
      %v789 = vmul.f32 %v725, %v785
      %v790 = vadd.f32 %v786, -0.001682827
      %v791 = vadd.f32 %v787, -0.001682827
      %v792 = vadd.f32 %v788, -0.001682827
      %v793 = vadd.f32 %v789, -0.001682827
      %v794 = vmul.f32 %v722, %v790
      %v795 = vmul.f32 %v723, %v791
      %v796 = vmul.f32 %v724, %v792
      %v797 = vmul.f32 %v725, %v793
      %v798 = vadd.f32 %v794, -0.0073733293
      %v799 = vadd.f32 %v795, -0.0073733293
      %v800 = vadd.f32 %v796, -0.0073733293
      %v801 = vadd.f32 %v797, -0.0073733293
      %v802 = vmul.f32 %v722, %v798
      %v803 = vmul.f32 %v723, %v799
      %v804 = vmul.f32 %v724, %v800
      %v805 = vmul.f32 %v725, %v801
      %v806 = vadd.f32 %v802, -0.014264739
      %v807 = vadd.f32 %v803, -0.014264739
      %v808 = vadd.f32 %v804, -0.014264739
      %v809 = vadd.f32 %v805, -0.014264739
      %v810 = vrcp.pop %v806
      %v811 = vrcp.pop %v807
      %v812 = vrcp.pop %v808
      %v813 = vrcp.pop %v809
      %v814 = vmul.f32 %v806, %v810
      %v815 = vmul.f32 %v807, %v811
      %v816 = vmul.f32 %v808, %v812
      %v817 = vmul.f32 %v809, %v813
      %v818 = vsub.f32 2.0, %v814
      %v819 = vsub.f32 2.0, %v815
      %v820 = vsub.f32 2.0, %v816
      %v821 = vsub.f32 2.0, %v817
      %v822 = vmul.f32 %v810, %v818
      %v823 = vmul.f32 %v811, %v819
      %v824 = vmul.f32 %v812, %v820
      %v825 = vmul.f32 %v813, %v821
      %v826 = vmul.f32 %v774, %v822
      %v827 = vmul.f32 %v775, %v823
      %v828 = vmul.f32 %v776, %v824
      %v829 = vmul.f32 %v777, %v825
      %v830 = vadd.f32 %v826, 1.0
      %v831 = vadd.f32 %v827, 1.0
      %v832 = vadd.f32 %v828, 1.0
      %v833 = vadd.f32 %v829, 1.0
      %v834 = vmul.f32 %v706, %v830
      %v835 = vmul.f32 %v707, %v831
      %v836 = vmul.f32 %v708, %v832
      %v837 = vmul.f32 %v709, %v833
      %838 = vst [vmem:[%s388] sm:$0xff] %v834
      %839 = vst [vmem:[%s388 + $0x8] sm:$0xff] %v835
      %840 = vst [vmem:[%s388 + $0x10] sm:$0xff] %v836
      %841 = vst [vmem:[%s388 + $0x18] sm:$0xff] %v837
      %s842 = smul.u32 4, %s23
      %p843 = scmp.lt.s32.totalorder %s22, 1
      %s844 = scalar_select %p843, %s22, 1
      %p845 = scmp.lt.s32.totalorder %s842, 3
      %s846 = scalar_select %p845, %s842, 3
      %s847 = smul.addr %s844, 4
      %s848 = sadd.s32 %s846, %s847
      %s849 = smul.addr %s848, 8
      %s850 = scalar_lea.vmem %s7, %s849
      // Predicated region
      $region49: #{_lambda_.3} parent=47 // pred_check
        %p851 = pneg %p218
      $region50: #{_lambda_.3} parent=47 // pred_check_branch
        %853 = sbr.rel (%p851) target = $region52
      $region51: #{_lambda_.3} parent=47 // pred_region
        %s854 = smul.u32 4, %s23
      $region52: #{_lambda_.3} parent=47 // pred_fallthru
        _
    $region48: #{_lambda_.3} parent=5 // pred_fallthru
      _
    %p855 = scmp.le.s32.totalorder 2, %s13
    // Predicated region
    $region53: #{_lambda_.3} parent=5 // pred_check
      %p856 = pneg %p855
    $region54: #{_lambda_.3} parent=5 // pred_check_branch
      %858 = sbr.rel (%p856) target = $region56
    $region55: #{_lambda_.3} parent=5 // pred_region
      %s859 = ssub.s32 %s13, 2
      // Predicated region
      $region57: #{_lambda_.3} parent=55 // pred_check
        %p860 = pneg %p224
      $region58: #{_lambda_.3} parent=55 // pred_check_branch
        %862 = sbr.rel (%p860) target = $region60
      $region59: #{_lambda_.3} parent=55 // pred_region
        %s863 = smul.u32 4, %s25
        %p864 = scmp.lt.s32.totalorder %s24, 1
        %s865 = scalar_select %p864, %s24, 1
        %p866 = scmp.lt.s32.totalorder %s863, 3
        %s867 = scalar_select %p866, %s863, 3
        %s868 = smul.addr %s865, 4
        %s869 = sadd.s32 %s867, %s868
        %s870 = smul.addr %s869, 8
        %s871 = scalar_lea.vmem %s7, %s870
      $region60: #{_lambda_.3} parent=55 // pred_fallthru
        _
    $region56: #{_lambda_.3} parent=5 // pred_fallthru
      _
  $region6: #{_lambda_.3} parent=0 // loop_footer
    %s17 = sadd.s32 1, %s13
  $region7: #{_lambda_.3} parent=0 // loop_footer_branch
    %12 = sbr.rel target = $region3
  $region8: #{_lambda_.3} parent=0 // loop_exit
    _

</llo_original>
